<compile_context>
chip_gen: v7x
topology: tpu7x:2x2x1
jax: 0.10.0
libtpu: 0.0.40
codegen_flags: <defaults>
</compile_context>

<pallas_src>
import functools

import jax
import jax.numpy as jnp
from jax import lax
from jax.experimental import pallas as pl
from jax.experimental.pallas import tpu as pltpu


def _gram_step(wl_ref, wr_ref, out_ref, acc_ref, *, m, tm, dim, dcol, ragged, split):
    """One grid step.

    wl_ref : [tm, dim]   W row tile (native dtype)
    wr_ref : [tm, dcol]  column block of the same tile (only when split=True)
    out_ref: [1, 1, 1]   per-column-block partial regularizer (f32)
    acc_ref: [dim, dcol] f32 Gram accumulator, resident across the reduction axis
    """
    c = pl.program_id(0)   # column block of G (parallel axis)
    i = pl.program_id(1)   # row tile of W  (reduction over C_out, last grid axis)

    @pl.when(i == 0)
    def _init():
        acc_ref[...] = jnp.zeros_like(acc_ref)

    valid = (m - i * tm) if ragged else None   # rows of this tile that are real

    wl = wl_ref[...]                                          # [tm, dim]
    if ragged:
        rows = lax.broadcasted_iota(jnp.int32, (tm, dim), 0)
        wl = jnp.where(rows < valid, wl, 0.0)                 # zero OOB tail rows
    wl = wl.astype(jnp.bfloat16)                              # bf16 MXU operands

    if split:
        wr = wr_ref[...]                                      # [tm, dcol]
        if ragged:
            rows_r = lax.broadcasted_iota(jnp.int32, (tm, dcol), 0)
            wr = jnp.where(rows_r < valid, wr, 0.0)
        wr = wr.astype(jnp.bfloat16)
    else:
        wr = wl

    # G_c += wl^T @ wr : bf16 inputs, f32 accumulation on the MXU.
    acc_ref[...] += lax.dot_general(
        wl, wr,
        dimension_numbers=(((0,), (0,)), ((), ())),
        preferred_element_type=jnp.float32)

    @pl.when(i == pl.num_programs(1) - 1)
    def _finalize():
        g = acc_ref[...]                                      # [dim, dcol] f32
        # sum((G_c - I_c)^2) = sum(G_c^2) - 2 * trace_slice + dcol
        sq = jnp.sum(jnp.sum(g * g, axis=1, keepdims=True),   # lanes first
                     axis=0, keepdims=True)                   # then sublanes
        rows_g = lax.broadcasted_iota(jnp.int32, (dim, dcol), 0)
        cols_g = lax.broadcasted_iota(jnp.int32, (dim, dcol), 1)
        col_off = (c * dcol) if split else 0
        diag = jnp.where(rows_g == cols_g + col_off, g, 0.0)
        tr = jnp.sum(jnp.sum(diag, axis=1, keepdims=True), axis=0, keepdims=True)
        out_ref[...] = (sq - 2.0 * tr + jnp.float32(dcol))[None]   # [1, 1, 1]


def _kernel_fused(w_ref, out_ref, acc_ref, *, m, tm, dim, dcol, ragged):
    _gram_step(w_ref, None, out_ref, acc_ref,
               m=m, tm=tm, dim=dim, dcol=dcol, ragged=ragged, split=False)


def _kernel_split(wl_ref, wr_ref, out_ref, acc_ref, *, m, tm, dim, dcol, ragged):
    _gram_step(wl_ref, wr_ref, out_ref, acc_ref,
               m=m, tm=tm, dim=dim, dcol=dcol, ragged=ragged, split=True)


def mahalanobis_regularizer(weight, *, tm=None, col_blocks=1):
    """sum((W^T W - I)^2) for a conv weight [C_out, dim, 1, 1] (or [C_out, dim]).

    col_blocks > 1 splits the columns of G across a leading "parallel" grid axis
    (useful on v7x with 2 TensorCores); it requires dim % (128*col_blocks) == 0
    and costs one extra read of W per extra column block.
    """
    if weight.ndim == 4:
        if weight.shape[2] != 1 or weight.shape[3] != 1:
            raise ValueError("expected 1x1 spatial dims, like the torch reference")
        w = weight[:, :, 0, 0]
    elif weight.ndim == 2:
        w = weight
    else:
        raise ValueError(f"unsupported weight rank {weight.ndim}")

    m, dim = w.shape

    if col_blocks > 1 and (dim % col_blocks != 0 or (dim // col_blocks) % 128 != 0):
        col_blocks = 1                       # column split needs 128-lane-aligned blocks
    dcol = dim // col_blocks

    itemsize = jnp.dtype(w.dtype).itemsize

    # Row-tile selection: largest tile a ~24 MiB double-buffer budget allows
    # (cap 1024), or one block when C_out is small.
    if tm is None:
        input_budget = 24 * 1024 * 1024
        tm = max(8, min(1024, input_budget // (2 * dim * itemsize)))
    if tm >= m:
        tm = m                               # single block (block == full dim is legal)
        n_blocks = 1
        ragged = False
    else:
        tm = max(8, tm - (tm % 8))           # sublane-aligned tile
        n_blocks = pl.cdiv(m, tm)
        ragged = (m % tm) != 0               # last tile masked in-kernel (no host pad)

    kern_kwargs = dict(m=m, tm=tm, dim=dim, dcol=dcol, ragged=ragged)
    if col_blocks == 1:
        kern = functools.partial(_kernel_fused, **kern_kwargs)
        in_specs = [pl.BlockSpec((tm, dim), lambda c, i: (i, 0))]
        operands = (w,)
        in_buf_bytes = 2 * tm * dim * itemsize
    else:
        kern = functools.partial(_kernel_split, **kern_kwargs)
        in_specs = [pl.BlockSpec((tm, dim), lambda c, i: (i, 0)),
                    pl.BlockSpec((tm, dcol), lambda c, i: (i, c))]
        operands = (w, w)
        in_buf_bytes = 2 * tm * dim * itemsize + 2 * tm * dcol * itemsize

    # Computed VMEM limit: double-buffered inputs + accumulator + headroom,
    # capped at 48 MiB (v7x has only 64 MiB per TC).
    acc_bytes = dim * dcol * 4
    vmem_limit = int(min(max(in_buf_bytes + acc_bytes + (4 << 20), 16 << 20), 48 << 20))

    out = pl.pallas_call(
        kern,
        out_shape=jax.ShapeDtypeStruct((col_blocks, 1, 1), jnp.float32),
        grid_spec=pltpu.PrefetchScalarGridSpec(
            num_scalar_prefetch=0,
            grid=(col_blocks, n_blocks),                 # reduction axis last
            in_specs=in_specs,
            out_specs=pl.BlockSpec((1, 1, 1), lambda c, i: (c, 0, 0)),
            scratch_shapes=[pltpu.VMEM((dim, dcol), jnp.float32)],
        ),
        compiler_params=pltpu.CompilerParams(
            dimension_semantics=("parallel", "arbitrary"),
            vmem_limit_bytes=vmem_limit,
        ),
    )(*operands)
    return jnp.sum(out)


def mahalanobis_constraint(params, param_name, **kwargs):
    """Mirror of Mahalanobis_Constraint.forward(): pick the matching '*weight*'
    parameter by name, then compute the orthogonality regularizer with Pallas."""
    # TODO(synk): select_param over named_parameters is host-side Python glue.
    weight = None
    for layer_name, layer_param in params.items():
        if param_name in layer_name and "weight" in layer_name:
            weight = layer_param
            break
    return mahalanobis_regularizer(weight, **kwargs)


if __name__ == "__main__":
    key = jax.random.PRNGKey(0)
    k0, k1 = jax.random.split(key)

    c_out, dim = 320, 256                      # small stand-in for the dim=512 conv weight
    w4d = jax.random.normal(k0, (c_out, dim, 1, 1), dtype=jnp.float32) * 0.05
    bias = jax.random.normal(k1, (c_out,), dtype=jnp.float32)
    params = {"backbone.proj.weight": w4d, "backbone.proj.bias": bias}

    # Pure-JAX reference (f32, HIGHEST precision).
    w2 = w4d[:, :, 0, 0]
    g_ref = jnp.matmul(w2.T, w2, precision=lax.Precision.HIGHEST)
    ref = float(jnp.sum((g_ref - jnp.eye(dim, dtype=jnp.float32)) ** 2))

    def check(val):
        val = float(jax.block_until_ready(val))
        assert jnp.isfinite(val)
        # bf16 MXU inputs + f32 accumulation vs f32 HIGHEST reference.
        assert abs(val - ref) <= 5e-2 * max(1.0, abs(ref)), (val, ref)

    # 1) Default path through the name-selection glue (single row block).
    check(mahalanobis_constraint(params, "proj"))
    # 2) Multi-tile reduction with an in-kernel masked ragged tail (320 = 2*128 + 64).
    check(mahalanobis_regularizer(w4d, tm=128))
    # 3) v7x-style parallel column split of G (two 128-lane column blocks).
    check(mahalanobis_regularizer(w4d, col_blocks=2))

    print("KERNEL_OK")
</pallas_src>

<mosaic_0001>
module attributes {stable_mosaic.version = 11 : i64} {
  func.func @_kernel_fused(%arg0: i32, %arg1: i32, %arg2: memref<320x256xf32, #tpu.memory_space<vmem>>, %arg3: memref<1x1x1xf32, #tpu.memory_space<vmem>>, %arg4: memref<256x256xf32, #tpu.memory_space<vmem>>) attributes {dimension_semantics = [#tpu.dimension_semantics<parallel>, #tpu.dimension_semantics<arbitrary>], iteration_bounds = array<i64: 1, 1>, scalar_prefetch = 0 : i64, scratch_operands = 1 : i64, tpu.core_type = #tpu.core_type<tc>, window_params = [{transform_indices = @transform_0, window_bounds = array<i64: 320, 256>}, {transform_indices = @transform_1, window_bounds = array<i64: 1, 1, 1>}]} {
    %c0_i32 = arith.constant 0 : i32
    %0 = arith.cmpi eq, %arg1, %c0_i32 : i32
    %1 = arith.extui %0 : i1 to i32
    %c0_i32_0 = arith.constant 0 : i32
    %2 = arith.cmpi ne, %1, %c0_i32_0 : i32
    scf.if %2 {
      %cst_8 = arith.constant 0.000000e+00 : f32
      %12 = vector.broadcast %cst_8 : f32 to vector<256x256xf32>
      %c0_9 = arith.constant 0 : index
      %c0_10 = arith.constant 0 : index
      %13 = vector.load %arg4[%c0_9, %c0_10] : memref<256x256xf32, #tpu.memory_space<vmem>>, vector<256x256xf32>
      tpu.vector_store %arg4[%c0_9, %c0_10], %12 {strides = array<i32>} : memref<256x256xf32, #tpu.memory_space<vmem>>, vector<256x256xf32>,
    } else {
    }
    %c0 = arith.constant 0 : index
    %c0_1 = arith.constant 0 : index
    %3 = vector.load %arg2[%c0, %c0_1] : memref<320x256xf32, #tpu.memory_space<vmem>>, vector<320x256xf32>
    %4 = arith.truncf %3 : vector<320x256xf32> to vector<320x256xbf16>
    %c0_2 = arith.constant 0 : index
    %c0_3 = arith.constant 0 : index
    %5 = vector.load %arg4[%c0_2, %c0_3] : memref<256x256xf32, #tpu.memory_space<vmem>>, vector<256x256xf32>
    %cst = arith.constant dense<0.000000e+00> : vector<256x256xf32>
    %6 = tpu.matmul %4, %4, %cst {dimension_numbers = #tpu.dot_dimension_numbers<[0], [0], [1], [1], [0, 1, 1, 1], [], []>} : vector<320x256xbf16>, vector<320x256xbf16>, vector<256x256xf32> -> vector<256x256xf32>
    %7 = arith.addf %5, %6 : vector<256x256xf32>
    %c0_4 = arith.constant 0 : index
    %c0_5 = arith.constant 0 : index
    %8 = vector.load %arg4[%c0_4, %c0_5] : memref<256x256xf32, #tpu.memory_space<vmem>>, vector<256x256xf32>
    tpu.vector_store %arg4[%c0_4, %c0_5], %7 {strides = array<i32>} : memref<256x256xf32, #tpu.memory_space<vmem>>, vector<256x256xf32>,
    %c0_i32_6 = arith.constant 0 : i32
    %9 = arith.cmpi eq, %arg1, %c0_i32_6 : i32
    %10 = arith.extui %9 : i1 to i32
    %c0_i32_7 = arith.constant 0 : i32
    %11 = arith.cmpi ne, %10, %c0_i32_7 : i32
    scf.if %11 {
      %c0_8 = arith.constant 0 : index
      %c0_9 = arith.constant 0 : index
      %12 = vector.load %arg4[%c0_8, %c0_9] : memref<256x256xf32, #tpu.memory_space<vmem>>, vector<256x256xf32>
      %13 = arith.mulf %12, %12 : vector<256x256xf32>
      %cst_10 = arith.constant dense<0.000000e+00> : vector<256xf32>
      %14 = vector.multi_reduction <add>, %13, %cst_10 [1] : vector<256x256xf32> to vector<256xf32>
      %15 = vector.shape_cast %14 : vector<256xf32> to vector<256x1xf32>
      %cst_11 = arith.constant dense<0.000000e+00> : vector<1xf32>
      %16 = vector.multi_reduction <add>, %15, %cst_11 [0] : vector<256x1xf32> to vector<1xf32>
      %17 = vector.shape_cast %16 : vector<1xf32> to vector<1x1xf32>
      %18 = tpu.iota {dimensions = array<i32: 0>} : vector<256x256xi32>
      %19 = tpu.iota {dimensions = array<i32: 1>} : vector<256x256xi32>
      %c0_i32_12 = arith.constant 0 : i32
      %20 = vector.broadcast %c0_i32_12 : i32 to vector<256x256xi32>
      %21 = arith.addi %19, %20 : vector<256x256xi32>
      %22 = arith.cmpi eq, %18, %21 : vector<256x256xi32>
      %cst_13 = arith.constant 0.000000e+00 : f32
      %23 = vector.broadcast %cst_13 : f32 to vector<256x256xf32>
      %24 = arith.select %22, %12, %23 : vector<256x256xi1>, vector<256x256xf32>
      %cst_14 = arith.constant dense<0.000000e+00> : vector<256xf32>
      %25 = vector.multi_reduction <add>, %24, %cst_14 [1] : vector<256x256xf32> to vector<256xf32>
      %26 = vector.shape_cast %25 : vector<256xf32> to vector<256x1xf32>
      %cst_15 = arith.constant dense<0.000000e+00> : vector<1xf32>
      %27 = vector.multi_reduction <add>, %26, %cst_15 [0] : vector<256x1xf32> to vector<1xf32>
      %28 = vector.shape_cast %27 : vector<1xf32> to vector<1x1xf32>
      %cst_16 = arith.constant 2.000000e+00 : f32
      %29 = vector.broadcast %cst_16 : f32 to vector<1x1xf32>
      %30 = arith.mulf %29, %28 : vector<1x1xf32>
      %31 = arith.subf %17, %30 : vector<1x1xf32>
      %cst_17 = arith.constant 2.560000e+02 : f32
      %32 = vector.broadcast %cst_17 : f32 to vector<1x1xf32>
      %33 = arith.addf %31, %32 : vector<1x1xf32>
      %34 = vector.shape_cast %33 : vector<1x1xf32> to vector<1x1x1xf32>
      %c0_18 = arith.constant 0 : index
      %c0_19 = arith.constant 0 : index
      %c0_20 = arith.constant 0 : index
      %35 = vector.load %arg3[%c0_18, %c0_19, %c0_20] : memref<1x1x1xf32, #tpu.memory_space<vmem>>, vector<1x1x1xf32>
      tpu.vector_store %arg3[%c0_18, %c0_19, %c0_20], %34 {strides = array<i32>} : memref<1x1x1xf32, #tpu.memory_space<vmem>>, vector<1x1x1xf32>,
    } else {
    }
    return
  }
  func.func @transform_0(%arg0: i32, %arg1: i32) -> (i32, i32) {
    %c0_i32 = arith.constant 0 : i32
    %c0_i32_0 = arith.constant 0 : i32
    return %arg1, %c0_i32 : i32, i32
  }
  func.func @transform_1(%arg0: i32, %arg1: i32) -> (i32, i32, i32) {
    %c0_i32 = arith.constant 0 : i32
    %c0_i32_0 = arith.constant 0 : i32
    %c0_i32_1 = arith.constant 0 : i32
    return %arg0, %c0_i32, %c0_i32_0 : i32, i32, i32
  }
}

</mosaic_0001>

<llo_original>
// kernel: tpu_custom_call.1
$region0: #{tpu_custom_call.1}
  #allocation0 [shape = 'u32[]', space=smem, size = 0x4, offset = 0x4, fixed_abs, tag = 'smem constant byte address 0x4 - core index']
  #allocation1 [shape = 'u32[144,128]{1,0:T(1,128)}', space=vmem, size = 0x12000, scoped, tag = 'internal scratch']
  #allocation2 [shape = 'f32[256,256]{1,0:T(8,128)}', space=vmem, size = 0x40000, scoped, tag = 'scratch operand']
  %s0 = inlined_call_operand.hbm [shape: f32[320,256], index: 0, kind: input, shape index: {}]
  %s1 = inlined_call_operand.hbm [shape: f32[1,1,1], index: 1, kind: output, shape index: {}]
  %s2 = sld [smem:[#allocation0]]
  $region26: #{tpu_custom_call.1} parent=0
    _
  %s4 = ssub.s32 1, %s2
  %s5 = scalar_select 0, %s4, %s2
  $region1: #{tpu_custom_call.1} parent=0
    #allocation3 [shape = 'u8[327680]{0}', space=vmem, size = 0x50000, scoped, tag = 'input window, operand 0, single buffered']
    #allocation4 [shape = 's32[1]{0}', space=sflag, size = 0x4, scoped, tag = 'scoped memory for tpu_custom_call.1']
    #allocation5 [shape = 's32[1]{0}', space=sflag, size = 0x4, scoped, tag = 'scoped memory for tpu_custom_call.1']
    #allocation6 [shape = 'u8[512]{0}', space=vmem, size = 0x400, scoped, tag = 'output window, operand 0, single buffered']
    %6 = vsyncpa [#allocation4], 0
    %7 = vsyncpa [#allocation5], 0
    // Predicated region
    $region2: #{tpu_custom_call.1} parent=1 // pred_check
      _
    $region3: #{tpu_custom_call.1} parent=1 // pred_check_branch
      %9 = sbr.rel (0) target = $region5
    $region4: #{tpu_custom_call.1} parent=1 // pred_region
      %s11 = ssub.s32 10240, 10240
      %12 = vsyncadd [#allocation4], %s11
      %s13 = sshll.u32 [#allocation3], 4
      %s14 = int_to_ptr.vmem [resolvable:$true] %s13
      %19 = dma.hbm_to_vmem [thread:$0]  %s0, 10240, %s14, [#allocation4], 256, 256, 16
    $region5: #{tpu_custom_call.1} parent=1 // pred_fallthru
      _
    // Predicated region
    $region6: #{tpu_custom_call.1} parent=1 // pred_check
      _
    $region7: #{tpu_custom_call.1} parent=1 // pred_check_branch
      %21 = sbr.rel (0) target = $region9
    $region8: #{tpu_custom_call.1} parent=1 // pred_region
      %22 = dma.done [#allocation4], 10240
    $region9: #{tpu_custom_call.1} parent=1 // pred_fallthru
      _
    %p24 = scmp.eq.s32.totalorder 0, 0
    // Predicated region
    $region10: #{tpu_custom_call.1} parent=1 // pred_check
      %p25 = pneg %p24
    $region11: #{tpu_custom_call.1} parent=1 // pred_check_branch
      %27 = sbr.rel (%p25) target = $region13
    $region12: #{tpu_custom_call.1} parent=1 // pred_region
      %28 = vst [vmem:[#allocation2] sm:$0xff] 0.0
      %29 = vst [vmem:[#allocation2 + $0x8] sm:$0xff] 0.0
      %30 = vst [vmem:[#allocation2 + $0x10] sm:$0xff] 0.0
      %31 = vst [vmem:[#allocation2 + $0x18] sm:$0xff] 0.0
      %32 = vst [vmem:[#allocation2 + $0x20] sm:$0xff] 0.0
      %33 = vst [vmem:[#allocation2 + $0x28] sm:$0xff] 0.0
      %34 = vst [vmem:[#allocation2 + $0x30] sm:$0xff] 0.0
      %35 = vst [vmem:[#allocation2 + $0x38] sm:$0xff] 0.0
      %36 = vst [vmem:[#allocation2 + $0x40] sm:$0xff] 0.0
      %37 = vst [vmem:[#allocation2 + $0x48] sm:$0xff] 0.0
      %38 = vst [vmem:[#allocation2 + $0x50] sm:$0xff] 0.0
      %39 = vst [vmem:[#allocation2 + $0x58] sm:$0xff] 0.0
      %40 = vst [vmem:[#allocation2 + $0x60] sm:$0xff] 0.0
      %41 = vst [vmem:[#allocation2 + $0x68] sm:$0xff] 0.0
      %42 = vst [vmem:[#allocation2 + $0x70] sm:$0xff] 0.0
      %43 = vst [vmem:[#allocation2 + $0x78] sm:$0xff] 0.0
      %44 = vst [vmem:[#allocation2 + $0x80] sm:$0xff] 0.0
      %45 = vst [vmem:[#allocation2 + $0x88] sm:$0xff] 0.0
      %46 = vst [vmem:[#allocation2 + $0x90] sm:$0xff] 0.0
      %47 = vst [vmem:[#allocation2 + $0x98] sm:$0xff] 0.0
      %48 = vst [vmem:[#allocation2 + $0xa0] sm:$0xff] 0.0
      %49 = vst [vmem:[#allocation2 + $0xa8] sm:$0xff] 0.0
      %50 = vst [vmem:[#allocation2 + $0xb0] sm:$0xff] 0.0
      %51 = vst [vmem:[#allocation2 + $0xb8] sm:$0xff] 0.0
      %52 = vst [vmem:[#allocation2 + $0xc0] sm:$0xff] 0.0
      %53 = vst [vmem:[#allocation2 + $0xc8] sm:$0xff] 0.0
      %54 = vst [vmem:[#allocation2 + $0xd0] sm:$0xff] 0.0
      %55 = vst [vmem:[#allocation2 + $0xd8] sm:$0xff] 0.0
      %56 = vst [vmem:[#allocation2 + $0xe0] sm:$0xff] 0.0
      %57 = vst [vmem:[#allocation2 + $0xe8] sm:$0xff] 0.0
      %58 = vst [vmem:[#allocation2 + $0xf0] sm:$0xff] 0.0
      %59 = vst [vmem:[#allocation2 + $0xf8] sm:$0xff] 0.0
      %60 = vst [vmem:[#allocation2 + $0x100] sm:$0xff] 0.0
      %61 = vst [vmem:[#allocation2 + $0x108] sm:$0xff] 0.0
      %62 = vst [vmem:[#allocation2 + $0x110] sm:$0xff] 0.0
      %63 = vst [vmem:[#allocation2 + $0x118] sm:$0xff] 0.0
      %64 = vst [vmem:[#allocation2 + $0x120] sm:$0xff] 0.0
      %65 = vst [vmem:[#allocation2 + $0x128] sm:$0xff] 0.0
      %66 = vst [vmem:[#allocation2 + $0x130] sm:$0xff] 0.0
      %67 = vst [vmem:[#allocation2 + $0x138] sm:$0xff] 0.0
      %68 = vst [vmem:[#allocation2 + $0x140] sm:$0xff] 0.0
      %69 = vst [vmem:[#allocation2 + $0x148] sm:$0xff] 0.0
      %70 = vst [vmem:[#allocation2 + $0x150] sm:$0xff] 0.0
      %71 = vst [vmem:[#allocation2 + $0x158] sm:$0xff] 0.0
      %72 = vst [vmem:[#allocation2 + $0x160] sm:$0xff] 0.0
      %73 = vst [vmem:[#allocation2 + $0x168] sm:$0xff] 0.0
      %74 = vst [vmem:[#allocation2 + $0x170] sm:$0xff] 0.0
      %75 = vst [vmem:[#allocation2 + $0x178] sm:$0xff] 0.0
      %76 = vst [vmem:[#allocation2 + $0x180] sm:$0xff] 0.0
      %77 = vst [vmem:[#allocation2 + $0x188] sm:$0xff] 0.0
      %78 = vst [vmem:[#allocation2 + $0x190] sm:$0xff] 0.0
      %79 = vst [vmem:[#allocation2 + $0x198] sm:$0xff] 0.0
      %80 = vst [vmem:[#allocation2 + $0x1a0] sm:$0xff] 0.0
      %81 = vst [vmem:[#allocation2 + $0x1a8] sm:$0xff] 0.0
      %82 = vst [vmem:[#allocation2 + $0x1b0] sm:$0xff] 0.0
      %83 = vst [vmem:[#allocation2 + $0x1b8] sm:$0xff] 0.0
      %84 = vst [vmem:[#allocation2 + $0x1c0] sm:$0xff] 0.0
      %85 = vst [vmem:[#allocation2 + $0x1c8] sm:$0xff] 0.0
      %86 = vst [vmem:[#allocation2 + $0x1d0] sm:$0xff] 0.0
      %87 = vst [vmem:[#allocation2 + $0x1d8] sm:$0xff] 0.0
      %88 = vst [vmem:[#allocation2 + $0x1e0] sm:$0xff] 0.0
      %89 = vst [vmem:[#allocation2 + $0x1e8] sm:$0xff] 0.0
      %90 = vst [vmem:[#allocation2 + $0x1f0] sm:$0xff] 0.0
      %91 = vst [vmem:[#allocation2 + $0x1f8] sm:$0xff] 0.0
    $region13: #{tpu_custom_call.1} parent=1 // pred_fallthru
      _
    %v92 = vld [vmem:[#allocation3] sm:$0xff]
    %v93 = vld [vmem:[#allocation3 + $0x8] sm:$0xff]
    %v94 = vld [vmem:[#allocation3 + $0x10] sm:$0xff]
    %v95 = vld [vmem:[#allocation3 + $0x18] sm:$0xff]
    %v96 = vld [vmem:[#allocation3 + $0x20] sm:$0xff]
    %v97 = vld [vmem:[#allocation3 + $0x28] sm:$0xff]
    %v98 = vld [vmem:[#allocation3 + $0x30] sm:$0xff]
    %v99 = vld [vmem:[#allocation3 + $0x38] sm:$0xff]
    %v100 = vld [vmem:[#allocation3 + $0x40] sm:$0xff]
    %v101 = vld [vmem:[#allocation3 + $0x48] sm:$0xff]
    %v102 = vld [vmem:[#allocation3 + $0x50] sm:$0xff]
    %v103 = vld [vmem:[#allocation3 + $0x58] sm:$0xff]
    %v104 = vld [vmem:[#allocation3 + $0x60] sm:$0xff]
    %v105 = vld [vmem:[#allocation3 + $0x68] sm:$0xff]
    %v106 = vld [vmem:[#allocation3 + $0x70] sm:$0xff]
    %v107 = vld [vmem:[#allocation3 + $0x78] sm:$0xff]
    %v108 = vld [vmem:[#allocation3 + $0x80] sm:$0xff]
    %v109 = vld [vmem:[#allocation3 + $0x88] sm:$0xff]
    %v110 = vld [vmem:[#allocation3 + $0x90] sm:$0xff]
    %v111 = vld [vmem:[#allocation3 + $0x98] sm:$0xff]
    %v112 = vld [vmem:[#allocation3 + $0xa0] sm:$0xff]
    %v113 = vld [vmem:[#allocation3 + $0xa8] sm:$0xff]
    %v114 = vld [vmem:[#allocation3 + $0xb0] sm:$0xff]
    %v115 = vld [vmem:[#allocation3 + $0xb8] sm:$0xff]
    %v116 = vld [vmem:[#allocation3 + $0xc0] sm:$0xff]
    %v117 = vld [vmem:[#allocation3 + $0xc8] sm:$0xff]
    %v118 = vld [vmem:[#allocation3 + $0xd0] sm:$0xff]
    %v119 = vld [vmem:[#allocation3 + $0xd8] sm:$0xff]
    %v120 = vld [vmem:[#allocation3 + $0xe0] sm:$0xff]
    %v121 = vld [vmem:[#allocation3 + $0xe8] sm:$0xff]
    %v122 = vld [vmem:[#allocation3 + $0xf0] sm:$0xff]
    %v123 = vld [vmem:[#allocation3 + $0xf8] sm:$0xff]
    %v124 = vld [vmem:[#allocation3 + $0x100] sm:$0xff]
    %v125 = vld [vmem:[#allocation3 + $0x108] sm:$0xff]
    %v126 = vld [vmem:[#allocation3 + $0x110] sm:$0xff]
    %v127 = vld [vmem:[#allocation3 + $0x118] sm:$0xff]
    %v128 = vld [vmem:[#allocation3 + $0x120] sm:$0xff]
    %v129 = vld [vmem:[#allocation3 + $0x128] sm:$0xff]
    %v130 = vld [vmem:[#allocation3 + $0x130] sm:$0xff]
    %v131 = vld [vmem:[#allocation3 + $0x138] sm:$0xff]
    %v132 = vld [vmem:[#allocation3 + $0x140] sm:$0xff]
    %v133 = vld [vmem:[#allocation3 + $0x148] sm:$0xff]
    %v134 = vld [vmem:[#allocation3 + $0x150] sm:$0xff]
    %v135 = vld [vmem:[#allocation3 + $0x158] sm:$0xff]
    %v136 = vld [vmem:[#allocation3 + $0x160] sm:$0xff]
    %v137 = vld [vmem:[#allocation3 + $0x168] sm:$0xff]
    %v138 = vld [vmem:[#allocation3 + $0x170] sm:$0xff]
    %v139 = vld [vmem:[#allocation3 + $0x178] sm:$0xff]
    %v140 = vld [vmem:[#allocation3 + $0x180] sm:$0xff]
    %v141 = vld [vmem:[#allocation3 + $0x188] sm:$0xff]
    %v142 = vld [vmem:[#allocation3 + $0x190] sm:$0xff]
    %v143 = vld [vmem:[#allocation3 + $0x198] sm:$0xff]
    %v144 = vld [vmem:[#allocation3 + $0x1a0] sm:$0xff]
    %v145 = vld [vmem:[#allocation3 + $0x1a8] sm:$0xff]
    %v146 = vld [vmem:[#allocation3 + $0x1b0] sm:$0xff]
    %v147 = vld [vmem:[#allocation3 + $0x1b8] sm:$0xff]
    %v148 = vld [vmem:[#allocation3 + $0x1c0] sm:$0xff]
    %v149 = vld [vmem:[#allocation3 + $0x1c8] sm:$0xff]
    %v150 = vld [vmem:[#allocation3 + $0x1d0] sm:$0xff]
    %v151 = vld [vmem:[#allocation3 + $0x1d8] sm:$0xff]
    %v152 = vld [vmem:[#allocation3 + $0x1e0] sm:$0xff]
    %v153 = vld [vmem:[#allocation3 + $0x1e8] sm:$0xff]
    %v154 = vld [vmem:[#allocation3 + $0x1f0] sm:$0xff]
    %v155 = vld [vmem:[#allocation3 + $0x1f8] sm:$0xff]
    %v156 = vld [vmem:[#allocation3 + $0x200] sm:$0xff]
    %v157 = vld [vmem:[#allocation3 + $0x208] sm:$0xff]
    %v158 = vld [vmem:[#allocation3 + $0x210] sm:$0xff]
    %v159 = vld [vmem:[#allocation3 + $0x218] sm:$0xff]
    %v160 = vld [vmem:[#allocation3 + $0x220] sm:$0xff]
    %v161 = vld [vmem:[#allocation3 + $0x228] sm:$0xff]
    %v162 = vld [vmem:[#allocation3 + $0x230] sm:$0xff]
    %v163 = vld [vmem:[#allocation3 + $0x238] sm:$0xff]
    %v164 = vld [vmem:[#allocation3 + $0x240] sm:$0xff]
    %v165 = vld [vmem:[#allocation3 + $0x248] sm:$0xff]
    %v166 = vld [vmem:[#allocation3 + $0x250] sm:$0xff]
    %v167 = vld [vmem:[#allocation3 + $0x258] sm:$0xff]
    %v168 = vld [vmem:[#allocation3 + $0x260] sm:$0xff]
    %v169 = vld [vmem:[#allocation3 + $0x268] sm:$0xff]
    %v170 = vld [vmem:[#allocation3 + $0x270] sm:$0xff]
    %v171 = vld [vmem:[#allocation3 + $0x278] sm:$0xff]
    %v172 = vpack.c.bf16 %v94, %v92
    %v173 = vpack.c.bf16 %v95, %v93
    %v174 = vpack.c.bf16 %v98, %v96
    %v175 = vpack.c.bf16 %v99, %v97
    %v176 = vpack.c.bf16 %v102, %v100
    %v177 = vpack.c.bf16 %v103, %v101
    %v178 = vpack.c.bf16 %v106, %v104
    %v179 = vpack.c.bf16 %v107, %v105
    %v180 = vpack.c.bf16 %v110, %v108
    %v181 = vpack.c.bf16 %v111, %v109
    %v182 = vpack.c.bf16 %v114, %v112
    %v183 = vpack.c.bf16 %v115, %v113
    %v184 = vpack.c.bf16 %v118, %v116
    %v185 = vpack.c.bf16 %v119, %v117
    %v186 = vpack.c.bf16 %v122, %v120
    %v187 = vpack.c.bf16 %v123, %v121
    %v188 = vpack.c.bf16 %v126, %v124
    %v189 = vpack.c.bf16 %v127, %v125
    %v190 = vpack.c.bf16 %v130, %v128
    %v191 = vpack.c.bf16 %v131, %v129
    %v192 = vpack.c.bf16 %v134, %v132
    %v193 = vpack.c.bf16 %v135, %v133
    %v194 = vpack.c.bf16 %v138, %v136
    %v195 = vpack.c.bf16 %v139, %v137
    %v196 = vpack.c.bf16 %v142, %v140
    %v197 = vpack.c.bf16 %v143, %v141
    %v198 = vpack.c.bf16 %v146, %v144
    %v199 = vpack.c.bf16 %v147, %v145
    %v200 = vpack.c.bf16 %v150, %v148
    %v201 = vpack.c.bf16 %v151, %v149
    %v202 = vpack.c.bf16 %v154, %v152
    %v203 = vpack.c.bf16 %v155, %v153
    %v204 = vpack.c.bf16 %v158, %v156
    %v205 = vpack.c.bf16 %v159, %v157
    %v206 = vpack.c.bf16 %v162, %v160
    %v207 = vpack.c.bf16 %v163, %v161
    %v208 = vpack.c.bf16 %v166, %v164
    %v209 = vpack.c.bf16 %v167, %v165
    %v210 = vpack.c.bf16 %v170, %v168
    %v211 = vpack.c.bf16 %v171, %v169
    %v212 = vld [vmem:[#allocation2] sm:$0xff]
    %v213 = vld [vmem:[#allocation2 + $0x8] sm:$0xff]
    %v214 = vld [vmem:[#allocation2 + $0x10] sm:$0xff]
    %v215 = vld [vmem:[#allocation2 + $0x18] sm:$0xff]
    %v216 = vld [vmem:[#allocation2 + $0x20] sm:$0xff]
    %v217 = vld [vmem:[#allocation2 + $0x28] sm:$0xff]
    %v218 = vld [vmem:[#allocation2 + $0x30] sm:$0xff]
    %v219 = vld [vmem:[#allocation2 + $0x38] sm:$0xff]
    %v220 = vld [vmem:[#allocation2 + $0x40] sm:$0xff]
    %v221 = vld [vmem:[#allocation2 + $0x48] sm:$0xff]
    %v222 = vld [vmem:[#allocation2 + $0x50] sm:$0xff]
    %v223 = vld [vmem:[#allocation2 + $0x58] sm:$0xff]
    %v224 = vld [vmem:[#allocation2 + $0x60] sm:$0xff]
    %v225 = vld [vmem:[#allocation2 + $0x68] sm:$0xff]
    %v226 = vld [vmem:[#allocation2 + $0x70] sm:$0xff]
    %v227 = vld [vmem:[#allocation2 + $0x78] sm:$0xff]
    %v228 = vld [vmem:[#allocation2 + $0x80] sm:$0xff]
    %v229 = vld [vmem:[#allocation2 + $0x88] sm:$0xff]
    %v230 = vld [vmem:[#allocation2 + $0x90] sm:$0xff]
    %v231 = vld [vmem:[#allocation2 + $0x98] sm:$0xff]
    %v232 = vld [vmem:[#allocation2 + $0xa0] sm:$0xff]
    %v233 = vld [vmem:[#allocation2 + $0xa8] sm:$0xff]
    %v234 = vld [vmem:[#allocation2 + $0xb0] sm:$0xff]
    %v235 = vld [vmem:[#allocation2 + $0xb8] sm:$0xff]
    %v236 = vld [vmem:[#allocation2 + $0xc0] sm:$0xff]
    %v237 = vld [vmem:[#allocation2 + $0xc8] sm:$0xff]
    %v238 = vld [vmem:[#allocation2 + $0xd0] sm:$0xff]
    %v239 = vld [vmem:[#allocation2 + $0xd8] sm:$0xff]
    %v240 = vld [vmem:[#allocation2 + $0xe0] sm:$0xff]
    %v241 = vld [vmem:[#allocation2 + $0xe8] sm:$0xff]
    %v242 = vld [vmem:[#allocation2 + $0xf0] sm:$0xff]
    %v243 = vld [vmem:[#allocation2 + $0xf8] sm:$0xff]
    %v244 = vld [vmem:[#allocation2 + $0x100] sm:$0xff]
    %v245 = vld [vmem:[#allocation2 + $0x108] sm:$0xff]
    %v246 = vld [vmem:[#allocation2 + $0x110] sm:$0xff]
    %v247 = vld [vmem:[#allocation2 + $0x118] sm:$0xff]
    %v248 = vld [vmem:[#allocation2 + $0x120] sm:$0xff]
    %v249 = vld [vmem:[#allocation2 + $0x128] sm:$0xff]
    %v250 = vld [vmem:[#allocation2 + $0x130] sm:$0xff]
    %v251 = vld [vmem:[#allocation2 + $0x138] sm:$0xff]
    %v252 = vld [vmem:[#allocation2 + $0x140] sm:$0xff]
    %v253 = vld [vmem:[#allocation2 + $0x148] sm:$0xff]
    %v254 = vld [vmem:[#allocation2 + $0x150] sm:$0xff]
    %v255 = vld [vmem:[#allocation2 + $0x158] sm:$0xff]
    %v256 = vld [vmem:[#allocation2 + $0x160] sm:$0xff]
    %v257 = vld [vmem:[#allocation2 + $0x168] sm:$0xff]
    %v258 = vld [vmem:[#allocation2 + $0x170] sm:$0xff]
    %v259 = vld [vmem:[#allocation2 + $0x178] sm:$0xff]
    %v260 = vld [vmem:[#allocation2 + $0x180] sm:$0xff]
    %v261 = vld [vmem:[#allocation2 + $0x188] sm:$0xff]
    %v262 = vld [vmem:[#allocation2 + $0x190] sm:$0xff]
    %v263 = vld [vmem:[#allocation2 + $0x198] sm:$0xff]
    %v264 = vld [vmem:[#allocation2 + $0x1a0] sm:$0xff]
    %v265 = vld [vmem:[#allocation2 + $0x1a8] sm:$0xff]
    %v266 = vld [vmem:[#allocation2 + $0x1b0] sm:$0xff]
    %v267 = vld [vmem:[#allocation2 + $0x1b8] sm:$0xff]
    %v268 = vld [vmem:[#allocation2 + $0x1c0] sm:$0xff]
    %v269 = vld [vmem:[#allocation2 + $0x1c8] sm:$0xff]
    %v270 = vld [vmem:[#allocation2 + $0x1d0] sm:$0xff]
    %v271 = vld [vmem:[#allocation2 + $0x1d8] sm:$0xff]
    %v272 = vld [vmem:[#allocation2 + $0x1e0] sm:$0xff]
    %v273 = vld [vmem:[#allocation2 + $0x1e8] sm:$0xff]
    %v274 = vld [vmem:[#allocation2 + $0x1f0] sm:$0xff]
    %v275 = vld [vmem:[#allocation2 + $0x1f8] sm:$0xff]
    %276 = vxpose.xlu0.c.b16.start [1/8] %v172, 128
    %277 = vxpose.xlu0.c.b16.cont [2/8] %v174, 128
    %278 = vxpose.xlu0.c.b16.cont [3/8] %v176, 128
    %279 = vxpose.xlu0.c.b16.cont [4/8] %v178, 128
    %280 = vxpose.xlu0.c.b16.cont [5/8] %v180, 128
    %281 = vxpose.xlu0.c.b16.cont [6/8] %v182, 128
    %282 = vxpose.xlu0.c.b16.cont [7/8] %v184, 128
    %283 = vxpose.xlu0.c.b16.end [8/8] %v186, 128
    %v284 = vpop.trf.xlu0
    %v285 = vpop.trf.xlu0
    %v286 = vpop.trf.xlu0
    %v287 = vpop.trf.xlu0
    %v288 = vpop.trf.xlu0
    %v289 = vpop.trf.xlu0
    %v290 = vpop.trf.xlu0
    %v291 = vpop.trf.xlu0
    %292 = vxpose.xlu0.c.b16.start [1/8] %v173, 128
    %293 = vxpose.xlu0.c.b16.cont [2/8] %v175, 128
    %294 = vxpose.xlu0.c.b16.cont [3/8] %v177, 128
    %295 = vxpose.xlu0.c.b16.cont [4/8] %v179, 128
    %296 = vxpose.xlu0.c.b16.cont [5/8] %v181, 128
    %297 = vxpose.xlu0.c.b16.cont [6/8] %v183, 128
    %298 = vxpose.xlu0.c.b16.cont [7/8] %v185, 128
    %299 = vxpose.xlu0.c.b16.end [8/8] %v187, 128
    %v300 = vpop.trf.xlu0
    %v301 = vpop.trf.xlu0
    %v302 = vpop.trf.xlu0
    %v303 = vpop.trf.xlu0
    %v304 = vpop.trf.xlu0
    %v305 = vpop.trf.xlu0
    %v306 = vpop.trf.xlu0
    %v307 = vpop.trf.xlu0
    %308 = vxpose.xlu0.c.b16.start [1/8] %v188, 128
    %309 = vxpose.xlu0.c.b16.cont [2/8] %v190, 128
    %310 = vxpose.xlu0.c.b16.cont [3/8] %v192, 128
    %311 = vxpose.xlu0.c.b16.cont [4/8] %v194, 128
    %312 = vxpose.xlu0.c.b16.cont [5/8] %v196, 128
    %313 = vxpose.xlu0.c.b16.cont [6/8] %v198, 128
    %314 = vxpose.xlu0.c.b16.cont [7/8] %v200, 128
    %315 = vxpose.xlu0.c.b16.end [8/8] %v202, 128
    %v316 = vpop.trf.xlu0
    %v317 = vpop.trf.xlu0
    %v318 = vpop.trf.xlu0
    %v319 = vpop.trf.xlu0
    %v320 = vpop.trf.xlu0
    %v321 = vpop.trf.xlu0
    %v322 = vpop.trf.xlu0
    %v323 = vpop.trf.xlu0
    %324 = vxpose.xlu0.c.b16.start [1/8] %v189, 128
    %325 = vxpose.xlu0.c.b16.cont [2/8] %v191, 128
    %326 = vxpose.xlu0.c.b16.cont [3/8] %v193, 128
    %327 = vxpose.xlu0.c.b16.cont [4/8] %v195, 128
    %328 = vxpose.xlu0.c.b16.cont [5/8] %v197, 128
    %329 = vxpose.xlu0.c.b16.cont [6/8] %v199, 128
    %330 = vxpose.xlu0.c.b16.cont [7/8] %v201, 128
    %331 = vxpose.xlu0.c.b16.end [8/8] %v203, 128
    %v332 = vpop.trf.xlu0
    %v333 = vpop.trf.xlu0
    %v334 = vpop.trf.xlu0
    %v335 = vpop.trf.xlu0
    %v336 = vpop.trf.xlu0
    %v337 = vpop.trf.xlu0
    %v338 = vpop.trf.xlu0
    %v339 = vpop.trf.xlu0
    %340 = vxpose.xlu0.c.b16.start [1/8] %v204, 128
    %341 = vxpose.xlu0.c.b16.cont [2/8] %v206, 128
    %342 = vxpose.xlu0.c.b16.cont [3/8] %v208, 128
    %343 = vxpose.xlu0.c.b16.cont [4/8] %v210, 128
    %344 = vxpose.xlu0.c.b16.cont [5/8] 0, 128
    %345 = vxpose.xlu0.c.b16.cont [6/8] 0, 128
    %346 = vxpose.xlu0.c.b16.cont [7/8] 0, 128
    %347 = vxpose.xlu0.c.b16.end [8/8] 0, 128
    %v348 = vpop.trf.xlu0
    %v349 = vpop.trf.xlu0
    %v350 = vpop.trf.xlu0
    %v351 = vpop.trf.xlu0
    %v352 = vpop.trf.xlu0
    %v353 = vpop.trf.xlu0
    %v354 = vpop.trf.xlu0
    %v355 = vpop.trf.xlu0
    %356 = vxpose.xlu0.c.b16.start [1/8] %v205, 128
    %357 = vxpose.xlu0.c.b16.cont [2/8] %v207, 128
    %358 = vxpose.xlu0.c.b16.cont [3/8] %v209, 128
    %359 = vxpose.xlu0.c.b16.cont [4/8] %v211, 128
    %360 = vxpose.xlu0.c.b16.cont [5/8] 0, 128
    %361 = vxpose.xlu0.c.b16.cont [6/8] 0, 128
    %362 = vxpose.xlu0.c.b16.cont [7/8] 0, 128
    %363 = vxpose.xlu0.c.b16.end [8/8] 0, 128
    %v364 = vpop.trf.xlu0
    %v365 = vpop.trf.xlu0
    %v366 = vpop.trf.xlu0
    %v367 = vpop.trf.xlu0
    %v368 = vpop.trf.xlu0
    %v369 = vpop.trf.xlu0
    %v370 = vpop.trf.xlu0
    %v371 = vpop.trf.xlu0
    %vm372 = vcmask 523264
    %v374 = vsel %vm372, %v348, 0
    %v377 = vsel %vm372, %v349, 0
    %v380 = vsel %vm372, %v350, 0
    %v383 = vsel %vm372, %v351, 0
    %v386 = vsel %vm372, %v352, 0
    %v389 = vsel %vm372, %v353, 0
    %v392 = vsel %vm372, %v354, 0
    %v395 = vsel %vm372, %v355, 0
    %v398 = vsel %vm372, %v364, 0
    %v401 = vsel %vm372, %v365, 0
    %v404 = vsel %vm372, %v366, 0
    %v407 = vsel %vm372, %v367, 0
    %v410 = vsel %vm372, %v368, 0
    %v413 = vsel %vm372, %v369, 0
    %v416 = vsel %vm372, %v370, 0
    %v419 = vsel %vm372, %v371, 0
    %421 = vmatprep.subr.bf16.mxu0 %v173
    %422 = vmatpush1.bf16.msra.mxu0 %v172
    %423 = vmatprep.subr.bf16.mxu0 %v175
    %424 = vmatpush1.bf16.msra.mxu0 %v174
    %425 = vmatprep.subr.bf16.mxu0 %v177
    %426 = vmatpush1.bf16.msra.mxu0 %v176
    %427 = vmatprep.subr.bf16.mxu0 %v179
    %428 = vmatpush1.bf16.msra.mxu0 %v178
    %429 = vmatprep.subr.bf16.mxu0 %v181
    %430 = vmatpush1.bf16.msra.mxu0 %v180
    %431 = vmatprep.subr.bf16.mxu0 %v183
    %432 = vmatpush1.bf16.msra.mxu0 %v182
    %433 = vmatprep.subr.bf16.mxu0 %v185
    %434 = vmatpush1.bf16.msra.mxu0 %v184
    %435 = vmatprep.subr.bf16.mxu0 %v187
    %436 = vmatpush1.bf16.msra.mxu0 %v186
    %437 = vmatprep.subr.bf16.mxu0 %v189
    %438 = vmatpush1.bf16.msra.mxu0 %v188
    %439 = vmatprep.subr.bf16.mxu0 %v191
    %440 = vmatpush1.bf16.msra.mxu0 %v190
    %441 = vmatprep.subr.bf16.mxu0 %v193
    %442 = vmatpush1.bf16.msra.mxu0 %v192
    %443 = vmatprep.subr.bf16.mxu0 %v195
    %444 = vmatpush1.bf16.msra.mxu0 %v194
    %445 = vmatprep.subr.bf16.mxu0 %v197
    %446 = vmatpush1.bf16.msra.mxu0 %v196
    %447 = vmatprep.subr.bf16.mxu0 %v199
    %448 = vmatpush1.bf16.msra.mxu0 %v198
    %449 = vmatprep.subr.bf16.mxu0 %v201
    %450 = vmatpush1.bf16.msra.mxu0 %v200
    %451 = vmatprep.subr.bf16.mxu0 %v203
    %452 = vmatpush1.bf16.msra.mxu0 %v202
    %453 = vmatprep.mubr.bf16.mxu0 %v316
    %454 = vmatmul.mubr.bf16.gmra.mrb[0].mxu0 %v284
    %v455 = vpop.f32.mrb[0].mxu0
    %v456 = vadd.f32 0.0, %v455
    %v457 = vpop.f32.mrb[0].mxu0
    %v458 = vadd.f32 0.0, %v457
    %v459 = vpop.f32.mrb[0].mxu0
    %v460 = vadd.f32 0.0, %v459
    %v461 = vpop.f32.mrb[0].mxu0
    %v462 = vadd.f32 0.0, %v461
    %463 = vmatprep.mubr.bf16.mxu0 %v317
    %464 = vmatmul.mubr.bf16.gmra.mrb[0].mxu0 %v285
    %v465 = vpop.f32.mrb[0].mxu0
    %v466 = vadd.f32 0.0, %v465
    %v467 = vpop.f32.mrb[0].mxu0
    %v468 = vadd.f32 0.0, %v467
    %v469 = vpop.f32.mrb[0].mxu0
    %v470 = vadd.f32 0.0, %v469
    %v471 = vpop.f32.mrb[0].mxu0
    %v472 = vadd.f32 0.0, %v471
    %473 = vmatprep.mubr.bf16.mxu0 %v318
    %474 = vmatmul.mubr.bf16.gmra.mrb[0].mxu0 %v286
    %v475 = vpop.f32.mrb[0].mxu0
    %v476 = vadd.f32 0.0, %v475
    %v477 = vpop.f32.mrb[0].mxu0
    %v478 = vadd.f32 0.0, %v477
    %v479 = vpop.f32.mrb[0].mxu0
    %v480 = vadd.f32 0.0, %v479
    %v481 = vpop.f32.mrb[0].mxu0
    %v482 = vadd.f32 0.0, %v481
    %483 = vmatprep.mubr.bf16.mxu0 %v319
    %484 = vmatmul.mubr.bf16.gmra.mrb[0].mxu0 %v287
    %v485 = vpop.f32.mrb[0].mxu0
    %v486 = vadd.f32 0.0, %v485
    %v487 = vpop.f32.mrb[0].mxu0
    %v488 = vadd.f32 0.0, %v487
    %v489 = vpop.f32.mrb[0].mxu0
    %v490 = vadd.f32 0.0, %v489
    %v491 = vpop.f32.mrb[0].mxu0
    %v492 = vadd.f32 0.0, %v491
    %493 = vmatprep.mubr.bf16.mxu0 %v320
    %494 = vmatmul.mubr.bf16.gmra.mrb[0].mxu0 %v288
    %v495 = vpop.f32.mrb[0].mxu0
    %v496 = vadd.f32 0.0, %v495
    %v497 = vpop.f32.mrb[0].mxu0
    %v498 = vadd.f32 0.0, %v497
    %v499 = vpop.f32.mrb[0].mxu0
    %v500 = vadd.f32 0.0, %v499
    %v501 = vpop.f32.mrb[0].mxu0
    %v502 = vadd.f32 0.0, %v501
    %503 = vmatprep.mubr.bf16.mxu0 %v321
    %504 = vmatmul.mubr.bf16.gmra.mrb[0].mxu0 %v289
    %v505 = vpop.f32.mrb[0].mxu0
    %v506 = vadd.f32 0.0, %v505
    %v507 = vpop.f32.mrb[0].mxu0
    %v508 = vadd.f32 0.0, %v507
    %v509 = vpop.f32.mrb[0].mxu0
    %v510 = vadd.f32 0.0, %v509
    %v511 = vpop.f32.mrb[0].mxu0
    %v512 = vadd.f32 0.0, %v511
    %513 = vmatprep.mubr.bf16.mxu0 %v322
    %514 = vmatmul.mubr.bf16.gmra.mrb[0].mxu0 %v290
    %v515 = vpop.f32.mrb[0].mxu0
    %v516 = vadd.f32 0.0, %v515
    %v517 = vpop.f32.mrb[0].mxu0
    %v518 = vadd.f32 0.0, %v517
    %v519 = vpop.f32.mrb[0].mxu0
    %v520 = vadd.f32 0.0, %v519
    %v521 = vpop.f32.mrb[0].mxu0
    %v522 = vadd.f32 0.0, %v521
    %523 = vmatprep.mubr.bf16.mxu0 %v323
    %524 = vmatmul.mubr.bf16.gmra.mrb[0].mxu0 %v291
    %v525 = vpop.f32.mrb[0].mxu0
    %v526 = vadd.f32 0.0, %v525
    %v527 = vpop.f32.mrb[0].mxu0
    %v528 = vadd.f32 0.0, %v527
    %v529 = vpop.f32.mrb[0].mxu0
    %v530 = vadd.f32 0.0, %v529
    %v531 = vpop.f32.mrb[0].mxu0
    %v532 = vadd.f32 0.0, %v531
    %533 = vmatprep.mubr.bf16.mxu0 %v332
    %534 = vmatmul.mubr.bf16.gmra.mrb[0].mxu0 %v300
    %v535 = vpop.f32.mrb[0].mxu0
    %v536 = vadd.f32 0.0, %v535
    %v537 = vpop.f32.mrb[0].mxu0
    %v538 = vadd.f32 0.0, %v537
    %v539 = vpop.f32.mrb[0].mxu0
    %v540 = vadd.f32 0.0, %v539
    %v541 = vpop.f32.mrb[0].mxu0
    %v542 = vadd.f32 0.0, %v541
    %543 = vmatprep.mubr.bf16.mxu0 %v333
    %544 = vmatmul.mubr.bf16.gmra.mrb[0].mxu0 %v301
    %v545 = vpop.f32.mrb[0].mxu0
    %v546 = vadd.f32 0.0, %v545
    %v547 = vpop.f32.mrb[0].mxu0
    %v548 = vadd.f32 0.0, %v547
    %v549 = vpop.f32.mrb[0].mxu0
    %v550 = vadd.f32 0.0, %v549
    %v551 = vpop.f32.mrb[0].mxu0
    %v552 = vadd.f32 0.0, %v551
    %553 = vmatprep.mubr.bf16.mxu0 %v334
    %554 = vmatmul.mubr.bf16.gmra.mrb[0].mxu0 %v302
    %v555 = vpop.f32.mrb[0].mxu0
    %v556 = vadd.f32 0.0, %v555
    %v557 = vpop.f32.mrb[0].mxu0
    %v558 = vadd.f32 0.0, %v557
    %v559 = vpop.f32.mrb[0].mxu0
    %v560 = vadd.f32 0.0, %v559
    %v561 = vpop.f32.mrb[0].mxu0
    %v562 = vadd.f32 0.0, %v561
    %563 = vmatprep.mubr.bf16.mxu0 %v335
    %564 = vmatmul.mubr.bf16.gmra.mrb[0].mxu0 %v303
    %v565 = vpop.f32.mrb[0].mxu0
    %v566 = vadd.f32 0.0, %v565
    %v567 = vpop.f32.mrb[0].mxu0
    %v568 = vadd.f32 0.0, %v567
    %v569 = vpop.f32.mrb[0].mxu0
    %v570 = vadd.f32 0.0, %v569
    %v571 = vpop.f32.mrb[0].mxu0
    %v572 = vadd.f32 0.0, %v571
    %573 = vmatprep.mubr.bf16.mxu0 %v336
    %574 = vmatmul.mubr.bf16.gmra.mrb[0].mxu0 %v304
    %v575 = vpop.f32.mrb[0].mxu0
    %v576 = vadd.f32 0.0, %v575
    %v577 = vpop.f32.mrb[0].mxu0
    %v578 = vadd.f32 0.0, %v577
    %v579 = vpop.f32.mrb[0].mxu0
    %v580 = vadd.f32 0.0, %v579
    %v581 = vpop.f32.mrb[0].mxu0
    %v582 = vadd.f32 0.0, %v581
    %583 = vmatprep.mubr.bf16.mxu0 %v337
    %584 = vmatmul.mubr.bf16.gmra.mrb[0].mxu0 %v305
    %v585 = vpop.f32.mrb[0].mxu0
    %v586 = vadd.f32 0.0, %v585
    %v587 = vpop.f32.mrb[0].mxu0
    %v588 = vadd.f32 0.0, %v587
    %v589 = vpop.f32.mrb[0].mxu0
    %v590 = vadd.f32 0.0, %v589
    %v591 = vpop.f32.mrb[0].mxu0
    %v592 = vadd.f32 0.0, %v591
    %593 = vmatprep.mubr.bf16.mxu0 %v338
    %594 = vmatmul.mubr.bf16.gmra.mrb[0].mxu0 %v306
    %v595 = vpop.f32.mrb[0].mxu0
    %v596 = vadd.f32 0.0, %v595
    %v597 = vpop.f32.mrb[0].mxu0
    %v598 = vadd.f32 0.0, %v597
    %v599 = vpop.f32.mrb[0].mxu0
    %v600 = vadd.f32 0.0, %v599
    %v601 = vpop.f32.mrb[0].mxu0
    %v602 = vadd.f32 0.0, %v601
    %603 = vmatprep.mubr.bf16.mxu0 %v339
    %604 = vmatmul.mubr.bf16.gmra.mrb[0].mxu0 %v307
    %v605 = vpop.f32.mrb[0].mxu0
    %v606 = vadd.f32 0.0, %v605
    %v607 = vpop.f32.mrb[0].mxu0
    %v608 = vadd.f32 0.0, %v607
    %v609 = vpop.f32.mrb[0].mxu0
    %v610 = vadd.f32 0.0, %v609
    %v611 = vpop.f32.mrb[0].mxu0
    %v612 = vadd.f32 0.0, %v611
    %613 = vdwg.mxu0
    %614 = vmatprep.subr.bf16.mxu0 %v205
    %615 = vmatpush1.bf16.msra.mxu0 %v204
    %616 = vmatprep.subr.bf16.mxu0 %v207
    %617 = vmatpush1.bf16.msra.mxu0 %v206
    %618 = vmatprep.subr.bf16.mxu0 %v209
    %619 = vmatpush1.bf16.msra.mxu0 %v208
    %620 = vmatprep.subr.bf16.mxu0 %v211
    %621 = vmatpush1.bf16.msra.mxu0 %v210
    %622 = vmatprep.subr.bf16.mxu0 0
    %623 = vmatpush1.bf16.msra.mxu0 0
    %624 = vmatprep.subr.bf16.mxu0 0
    %625 = vmatpush1.bf16.msra.mxu0 0
    %626 = vmatprep.subr.bf16.mxu0 0
    %627 = vmatpush1.bf16.msra.mxu0 0
    %628 = vmatprep.subr.bf16.mxu0 0
    %629 = vmatpush1.bf16.msra.mxu0 0
    %630 = vmatprep.subr.bf16.mxu0 0
    %631 = vmatpush1.bf16.msra.mxu0 0
    %632 = vmatprep.subr.bf16.mxu0 0
    %633 = vmatpush1.bf16.msra.mxu0 0
    %634 = vmatprep.subr.bf16.mxu0 0
    %635 = vmatpush1.bf16.msra.mxu0 0
    %636 = vmatprep.subr.bf16.mxu0 0
    %637 = vmatpush1.bf16.msra.mxu0 0
    %638 = vmatprep.subr.bf16.mxu0 0
    %639 = vmatpush1.bf16.msra.mxu0 0
    %640 = vmatprep.subr.bf16.mxu0 0
    %641 = vmatpush1.bf16.msra.mxu0 0
    %642 = vmatprep.subr.bf16.mxu0 0
    %643 = vmatpush1.bf16.msra.mxu0 0
    %644 = vmatprep.subr.bf16.mxu0 0
    %645 = vmatpush1.bf16.msra.mxu0 0
    %646 = vmatprep.mubr.bf16.mxu0 0
    %647 = vmatmul.mubr.bf16.gmra.mrb[0].mxu0 %v374
    %v648 = vpop.f32.mrb[0].mxu0
    %v649 = vadd.f32 %v456, %v648
    %v650 = vpop.f32.mrb[0].mxu0
    %v651 = vadd.f32 %v458, %v650
    %v652 = vpop.f32.mrb[0].mxu0
    %v653 = vadd.f32 %v460, %v652
    %v654 = vpop.f32.mrb[0].mxu0
    %v655 = vadd.f32 %v462, %v654
    %656 = vmatprep.mubr.bf16.mxu0 0
    %657 = vmatmul.mubr.bf16.gmra.mrb[0].mxu0 %v377
    %v658 = vpop.f32.mrb[0].mxu0
    %v659 = vadd.f32 %v466, %v658
    %v660 = vpop.f32.mrb[0].mxu0
    %v661 = vadd.f32 %v468, %v660
    %v662 = vpop.f32.mrb[0].mxu0
    %v663 = vadd.f32 %v470, %v662
    %v664 = vpop.f32.mrb[0].mxu0
    %v665 = vadd.f32 %v472, %v664
    %666 = vmatprep.mubr.bf16.mxu0 0
    %667 = vmatmul.mubr.bf16.gmra.mrb[0].mxu0 %v380
    %v668 = vpop.f32.mrb[0].mxu0
    %v669 = vadd.f32 %v476, %v668
    %v670 = vpop.f32.mrb[0].mxu0
    %v671 = vadd.f32 %v478, %v670
    %v672 = vpop.f32.mrb[0].mxu0
    %v673 = vadd.f32 %v480, %v672
    %v674 = vpop.f32.mrb[0].mxu0
    %v675 = vadd.f32 %v482, %v674
    %676 = vmatprep.mubr.bf16.mxu0 0
    %677 = vmatmul.mubr.bf16.gmra.mrb[0].mxu0 %v383
    %v678 = vpop.f32.mrb[0].mxu0
    %v679 = vadd.f32 %v486, %v678
    %v680 = vpop.f32.mrb[0].mxu0
    %v681 = vadd.f32 %v488, %v680
    %v682 = vpop.f32.mrb[0].mxu0
    %v683 = vadd.f32 %v490, %v682
    %v684 = vpop.f32.mrb[0].mxu0
    %v685 = vadd.f32 %v492, %v684
    %686 = vmatprep.mubr.bf16.mxu0 0
    %687 = vmatmul.mubr.bf16.gmra.mrb[0].mxu0 %v386
    %v688 = vpop.f32.mrb[0].mxu0
    %v689 = vadd.f32 %v496, %v688
    %v690 = vpop.f32.mrb[0].mxu0
    %v691 = vadd.f32 %v498, %v690
    %v692 = vpop.f32.mrb[0].mxu0
    %v693 = vadd.f32 %v500, %v692
    %v694 = vpop.f32.mrb[0].mxu0
    %v695 = vadd.f32 %v502, %v694
    %696 = vmatprep.mubr.bf16.mxu0 0
    %697 = vmatmul.mubr.bf16.gmra.mrb[0].mxu0 %v389
    %v698 = vpop.f32.mrb[0].mxu0
    %v699 = vadd.f32 %v506, %v698
    %v700 = vpop.f32.mrb[0].mxu0
    %v701 = vadd.f32 %v508, %v700
    %v702 = vpop.f32.mrb[0].mxu0
    %v703 = vadd.f32 %v510, %v702
    %v704 = vpop.f32.mrb[0].mxu0
    %v705 = vadd.f32 %v512, %v704
    %706 = vmatprep.mubr.bf16.mxu0 0
    %707 = vmatmul.mubr.bf16.gmra.mrb[0].mxu0 %v392
    %v708 = vpop.f32.mrb[0].mxu0
    %v709 = vadd.f32 %v516, %v708
    %v710 = vpop.f32.mrb[0].mxu0
    %v711 = vadd.f32 %v518, %v710
    %v712 = vpop.f32.mrb[0].mxu0
    %v713 = vadd.f32 %v520, %v712
    %v714 = vpop.f32.mrb[0].mxu0
    %v715 = vadd.f32 %v522, %v714
    %716 = vmatprep.mubr.bf16.mxu0 0
    %717 = vmatmul.mubr.bf16.gmra.mrb[0].mxu0 %v395
    %v718 = vpop.f32.mrb[0].mxu0
    %v719 = vadd.f32 %v526, %v718
    %v720 = vpop.f32.mrb[0].mxu0
    %v721 = vadd.f32 %v528, %v720
    %v722 = vpop.f32.mrb[0].mxu0
    %v723 = vadd.f32 %v530, %v722
    %v724 = vpop.f32.mrb[0].mxu0
    %v725 = vadd.f32 %v532, %v724
    %726 = vmatprep.mubr.bf16.mxu0 0
    %727 = vmatmul.mubr.bf16.gmra.mrb[0].mxu0 %v398
    %v728 = vpop.f32.mrb[0].mxu0
    %v729 = vadd.f32 %v536, %v728
    %v730 = vpop.f32.mrb[0].mxu0
    %v731 = vadd.f32 %v538, %v730
    %v732 = vpop.f32.mrb[0].mxu0
    %v733 = vadd.f32 %v540, %v732
    %v734 = vpop.f32.mrb[0].mxu0
    %v735 = vadd.f32 %v542, %v734
    %736 = vmatprep.mubr.bf16.mxu0 0
    %737 = vmatmul.mubr.bf16.gmra.mrb[0].mxu0 %v401
    %v738 = vpop.f32.mrb[0].mxu0
    %v739 = vadd.f32 %v546, %v738
    %v740 = vpop.f32.mrb[0].mxu0
    %v741 = vadd.f32 %v548, %v740
    %v742 = vpop.f32.mrb[0].mxu0
    %v743 = vadd.f32 %v550, %v742
    %v744 = vpop.f32.mrb[0].mxu0
    %v745 = vadd.f32 %v552, %v744
    %746 = vmatprep.mubr.bf16.mxu0 0
    %747 = vmatmul.mubr.bf16.gmra.mrb[0].mxu0 %v404
    %v748 = vpop.f32.mrb[0].mxu0
    %v749 = vadd.f32 %v556, %v748
    %v750 = vpop.f32.mrb[0].mxu0
    %v751 = vadd.f32 %v558, %v750
    %v752 = vpop.f32.mrb[0].mxu0
    %v753 = vadd.f32 %v560, %v752
    %v754 = vpop.f32.mrb[0].mxu0
    %v755 = vadd.f32 %v562, %v754
    %756 = vmatprep.mubr.bf16.mxu0 0
    %757 = vmatmul.mubr.bf16.gmra.mrb[0].mxu0 %v407
    %v758 = vpop.f32.mrb[0].mxu0
    %v759 = vadd.f32 %v566, %v758
    %v760 = vpop.f32.mrb[0].mxu0
    %v761 = vadd.f32 %v568, %v760
    %v762 = vpop.f32.mrb[0].mxu0
    %v763 = vadd.f32 %v570, %v762
    %v764 = vpop.f32.mrb[0].mxu0
    %v765 = vadd.f32 %v572, %v764
    %766 = vmatprep.mubr.bf16.mxu0 0
    %767 = vmatmul.mubr.bf16.gmra.mrb[0].mxu0 %v410
    %v768 = vpop.f32.mrb[0].mxu0
    %v769 = vadd.f32 %v576, %v768
    %v770 = vpop.f32.mrb[0].mxu0
    %v771 = vadd.f32 %v578, %v770
    %v772 = vpop.f32.mrb[0].mxu0
    %v773 = vadd.f32 %v580, %v772
    %v774 = vpop.f32.mrb[0].mxu0
    %v775 = vadd.f32 %v582, %v774
    %776 = vmatprep.mubr.bf16.mxu0 0
    %777 = vmatmul.mubr.bf16.gmra.mrb[0].mxu0 %v413
    %v778 = vpop.f32.mrb[0].mxu0
    %v779 = vadd.f32 %v586, %v778
    %v780 = vpop.f32.mrb[0].mxu0
    %v781 = vadd.f32 %v588, %v780
    %v782 = vpop.f32.mrb[0].mxu0
    %v783 = vadd.f32 %v590, %v782
    %v784 = vpop.f32.mrb[0].mxu0
    %v785 = vadd.f32 %v592, %v784
    %786 = vmatprep.mubr.bf16.mxu0 0
    %787 = vmatmul.mubr.bf16.gmra.mrb[0].mxu0 %v416
    %v788 = vpop.f32.mrb[0].mxu0
    %v789 = vadd.f32 %v596, %v788
    %v790 = vpop.f32.mrb[0].mxu0
    %v791 = vadd.f32 %v598, %v790
    %v792 = vpop.f32.mrb[0].mxu0
    %v793 = vadd.f32 %v600, %v792
    %v794 = vpop.f32.mrb[0].mxu0
    %v795 = vadd.f32 %v602, %v794
    %796 = vmatprep.mubr.bf16.mxu0 0
    %797 = vmatmul.mubr.bf16.gmra.mrb[0].mxu0 %v419
    %v798 = vpop.f32.mrb[0].mxu0
    %v799 = vadd.f32 %v606, %v798
    %v800 = vpop.f32.mrb[0].mxu0
    %v801 = vadd.f32 %v608, %v800
    %v802 = vpop.f32.mrb[0].mxu0
    %v803 = vadd.f32 %v610, %v802
    %v804 = vpop.f32.mrb[0].mxu0
    %v805 = vadd.f32 %v612, %v804
    %806 = vdwg.mxu0
    %v807 = vadd.f32 %v212, %v649
    %v808 = vadd.f32 %v213, %v651
    %v809 = vadd.f32 %v214, %v653
    %v810 = vadd.f32 %v215, %v655
    %v811 = vadd.f32 %v216, %v659
    %v812 = vadd.f32 %v217, %v661
    %v813 = vadd.f32 %v218, %v663
    %v814 = vadd.f32 %v219, %v665
    %v815 = vadd.f32 %v220, %v669
    %v816 = vadd.f32 %v221, %v671
    %v817 = vadd.f32 %v222, %v673
    %v818 = vadd.f32 %v223, %v675
    %v819 = vadd.f32 %v224, %v679
    %v820 = vadd.f32 %v225, %v681
    %v821 = vadd.f32 %v226, %v683
    %v822 = vadd.f32 %v227, %v685
    %v823 = vadd.f32 %v228, %v689
    %v824 = vadd.f32 %v229, %v691
    %v825 = vadd.f32 %v230, %v693
    %v826 = vadd.f32 %v231, %v695
    %v827 = vadd.f32 %v232, %v699
    %v828 = vadd.f32 %v233, %v701
    %v829 = vadd.f32 %v234, %v703
    %v830 = vadd.f32 %v235, %v705
    %v831 = vadd.f32 %v236, %v709
    %v832 = vadd.f32 %v237, %v711
    %v833 = vadd.f32 %v238, %v713
    %v834 = vadd.f32 %v239, %v715
    %v835 = vadd.f32 %v240, %v719
    %v836 = vadd.f32 %v241, %v721
    %v837 = vadd.f32 %v242, %v723
    %v838 = vadd.f32 %v243, %v725
    %v839 = vadd.f32 %v244, %v729
    %v840 = vadd.f32 %v245, %v731
    %v841 = vadd.f32 %v246, %v733
    %v842 = vadd.f32 %v247, %v735
    %v843 = vadd.f32 %v248, %v739
    %v844 = vadd.f32 %v249, %v741
    %v845 = vadd.f32 %v250, %v743
    %v846 = vadd.f32 %v251, %v745
    %v847 = vadd.f32 %v252, %v749
    %v848 = vadd.f32 %v253, %v751
    %v849 = vadd.f32 %v254, %v753
    %v850 = vadd.f32 %v255, %v755
    %v851 = vadd.f32 %v256, %v759
    %v852 = vadd.f32 %v257, %v761
    %v853 = vadd.f32 %v258, %v763
    %v854 = vadd.f32 %v259, %v765
    %v855 = vadd.f32 %v260, %v769
    %v856 = vadd.f32 %v261, %v771
    %v857 = vadd.f32 %v262, %v773
    %v858 = vadd.f32 %v263, %v775
    %v859 = vadd.f32 %v264, %v779
    %v860 = vadd.f32 %v265, %v781
    %v861 = vadd.f32 %v266, %v783
    %v862 = vadd.f32 %v267, %v785
    %v863 = vadd.f32 %v268, %v789
    %v864 = vadd.f32 %v269, %v791
    %v865 = vadd.f32 %v270, %v793
    %v866 = vadd.f32 %v271, %v795
    %v867 = vadd.f32 %v272, %v799
    %v868 = vadd.f32 %v273, %v801
    %v869 = vadd.f32 %v274, %v803
    %v870 = vadd.f32 %v275, %v805
    %871 = vst [vmem:[#allocation2] sm:$0xff] %v807
    %872 = vst [vmem:[#allocation2 + $0x8] sm:$0xff] %v808
    %873 = vst [vmem:[#allocation2 + $0x10] sm:$0xff] %v809
    %874 = vst [vmem:[#allocation2 + $0x18] sm:$0xff] %v810
    %875 = vst [vmem:[#allocation2 + $0x20] sm:$0xff] %v811
    %876 = vst [vmem:[#allocation2 + $0x28] sm:$0xff] %v812
    %877 = vst [vmem:[#allocation2 + $0x30] sm:$0xff] %v813
    %878 = vst [vmem:[#allocation2 + $0x38] sm:$0xff] %v814
    %879 = vst [vmem:[#allocation2 + $0x40] sm:$0xff] %v815
    %880 = vst [vmem:[#allocation2 + $0x48] sm:$0xff] %v816
    %881 = vst [vmem:[#allocation2 + $0x50] sm:$0xff] %v817
    %882 = vst [vmem:[#allocation2 + $0x58] sm:$0xff] %v818
    %883 = vst [vmem:[#allocation2 + $0x60] sm:$0xff] %v819
    %884 = vst [vmem:[#allocation2 + $0x68] sm:$0xff] %v820
    %885 = vst [vmem:[#allocation2 + $0x70] sm:$0xff] %v821
    %886 = vst [vmem:[#allocation2 + $0x78] sm:$0xff] %v822
    %887 = vst [vmem:[#allocation2 + $0x80] sm:$0xff] %v823
    %888 = vst [vmem:[#allocation2 + $0x88] sm:$0xff] %v824
    %889 = vst [vmem:[#allocation2 + $0x90] sm:$0xff] %v825
    %890 = vst [vmem:[#allocation2 + $0x98] sm:$0xff] %v826
    %891 = vst [vmem:[#allocation2 + $0xa0] sm:$0xff] %v827
    %892 = vst [vmem:[#allocation2 + $0xa8] sm:$0xff] %v828
    %893 = vst [vmem:[#allocation2 + $0xb0] sm:$0xff] %v829
    %894 = vst [vmem:[#allocation2 + $0xb8] sm:$0xff] %v830
    %895 = vst [vmem:[#allocation2 + $0xc0] sm:$0xff] %v831
    %896 = vst [vmem:[#allocation2 + $0xc8] sm:$0xff] %v832
    %897 = vst [vmem:[#allocation2 + $0xd0] sm:$0xff] %v833
    %898 = vst [vmem:[#allocation2 + $0xd8] sm:$0xff] %v834
    %899 = vst [vmem:[#allocation2 + $0xe0] sm:$0xff] %v835
    %900 = vst [vmem:[#allocation2 + $0xe8] sm:$0xff] %v836
    %901 = vst [vmem:[#allocation2 + $0xf0] sm:$0xff] %v837
    %902 = vst [vmem:[#allocation2 + $0xf8] sm:$0xff] %v838
    %903 = vst [vmem:[#allocation2 + $0x100] sm:$0xff] %v839
    %904 = vst [vmem:[#allocation2 + $0x108] sm:$0xff] %v840
    %905 = vst [vmem:[#allocation2 + $0x110] sm:$0xff] %v841
    %906 = vst [vmem:[#allocation2 + $0x118] sm:$0xff] %v842
    %907 = vst [vmem:[#allocation2 + $0x120] sm:$0xff] %v843
    %908 = vst [vmem:[#allocation2 + $0x128] sm:$0xff] %v844
    %909 = vst [vmem:[#allocation2 + $0x130] sm:$0xff] %v845
    %910 = vst [vmem:[#allocation2 + $0x138] sm:$0xff] %v846
    %911 = vst [vmem:[#allocation2 + $0x140] sm:$0xff] %v847
    %912 = vst [vmem:[#allocation2 + $0x148] sm:$0xff] %v848
    %913 = vst [vmem:[#allocation2 + $0x150] sm:$0xff] %v849
    %914 = vst [vmem:[#allocation2 + $0x158] sm:$0xff] %v850
    %915 = vst [vmem:[#allocation2 + $0x160] sm:$0xff] %v851
    %916 = vst [vmem:[#allocation2 + $0x168] sm:$0xff] %v852
    %917 = vst [vmem:[#allocation2 + $0x170] sm:$0xff] %v853
    %918 = vst [vmem:[#allocation2 + $0x178] sm:$0xff] %v854
    %919 = vst [vmem:[#allocation2 + $0x180] sm:$0xff] %v855
    %920 = vst [vmem:[#allocation2 + $0x188] sm:$0xff] %v856
    %921 = vst [vmem:[#allocation2 + $0x190] sm:$0xff] %v857
    %922 = vst [vmem:[#allocation2 + $0x198] sm:$0xff] %v858
    %923 = vst [vmem:[#allocation2 + $0x1a0] sm:$0xff] %v859
    %924 = vst [vmem:[#allocation2 + $0x1a8] sm:$0xff] %v860
    %925 = vst [vmem:[#allocation2 + $0x1b0] sm:$0xff] %v861
    %926 = vst [vmem:[#allocation2 + $0x1b8] sm:$0xff] %v862
    %927 = vst [vmem:[#allocation2 + $0x1c0] sm:$0xff] %v863
    %928 = vst [vmem:[#allocation2 + $0x1c8] sm:$0xff] %v864
    %929 = vst [vmem:[#allocation2 + $0x1d0] sm:$0xff] %v865
    %930 = vst [vmem:[#allocation2 + $0x1d8] sm:$0xff] %v866
    %931 = vst [vmem:[#allocation2 + $0x1e0] sm:$0xff] %v867
    %932 = vst [vmem:[#allocation2 + $0x1e8] sm:$0xff] %v868
    %933 = vst [vmem:[#allocation2 + $0x1f0] sm:$0xff] %v869
    %934 = vst [vmem:[#allocation2 + $0x1f8] sm:$0xff] %v870
    // Predicated region
    $region14: #{tpu_custom_call.1} parent=1 // pred_check
      %p935 = pneg %p24
    $region15: #{tpu_custom_call.1} parent=1 // pred_check_branch
      %937 = sbr.rel (%p935) target = $region17
    $region16: #{tpu_custom_call.1} parent=1 // pred_region
      %v938 = vld [vmem:[#allocation2] sm:$0xff]
      %v939 = vld [vmem:[#allocation2 + $0x8] sm:$0xff]
      %v940 = vld [vmem:[#allocation2 + $0x10] sm:$0xff]
      %v941 = vld [vmem:[#allocation2 + $0x18] sm:$0xff]
      %v942 = vld [vmem:[#allocation2 + $0x20] sm:$0xff]
      %v943 = vld [vmem:[#allocation2 + $0x28] sm:$0xff]
      %v944 = vld [vmem:[#allocation2 + $0x30] sm:$0xff]
      %v945 = vld [vmem:[#allocation2 + $0x38] sm:$0xff]
      %v946 = vld [vmem:[#allocation2 + $0x40] sm:$0xff]
      %v947 = vld [vmem:[#allocation2 + $0x48] sm:$0xff]
      %v948 = vld [vmem:[#allocation2 + $0x50] sm:$0xff]
      %v949 = vld [vmem:[#allocation2 + $0x58] sm:$0xff]
      %v950 = vld [vmem:[#allocation2 + $0x60] sm:$0xff]
      %v951 = vld [vmem:[#allocation2 + $0x68] sm:$0xff]
      %v952 = vld [vmem:[#allocation2 + $0x70] sm:$0xff]
      %v953 = vld [vmem:[#allocation2 + $0x78] sm:$0xff]
      %v954 = vld [vmem:[#allocation2 + $0x80] sm:$0xff]
      %v955 = vld [vmem:[#allocation2 + $0x88] sm:$0xff]
      %v956 = vld [vmem:[#allocation2 + $0x90] sm:$0xff]
      %v957 = vld [vmem:[#allocation2 + $0x98] sm:$0xff]
      %v958 = vld [vmem:[#allocation2 + $0xa0] sm:$0xff]
      %v959 = vld [vmem:[#allocation2 + $0xa8] sm:$0xff]
      %v960 = vld [vmem:[#allocation2 + $0xb0] sm:$0xff]
      %v961 = vld [vmem:[#allocation2 + $0xb8] sm:$0xff]
      %v962 = vld [vmem:[#allocation2 + $0xc0] sm:$0xff]
      %v963 = vld [vmem:[#allocation2 + $0xc8] sm:$0xff]
      %v964 = vld [vmem:[#allocation2 + $0xd0] sm:$0xff]
      %v965 = vld [vmem:[#allocation2 + $0xd8] sm:$0xff]
      %v966 = vld [vmem:[#allocation2 + $0xe0] sm:$0xff]
      %v967 = vld [vmem:[#allocation2 + $0xe8] sm:$0xff]
      %v968 = vld [vmem:[#allocation2 + $0xf0] sm:$0xff]
      %v969 = vld [vmem:[#allocation2 + $0xf8] sm:$0xff]
      %v970 = vld [vmem:[#allocation2 + $0x100] sm:$0xff]
      %v971 = vld [vmem:[#allocation2 + $0x108] sm:$0xff]
      %v972 = vld [vmem:[#allocation2 + $0x110] sm:$0xff]
      %v973 = vld [vmem:[#allocation2 + $0x118] sm:$0xff]
      %v974 = vld [vmem:[#allocation2 + $0x120] sm:$0xff]
      %v975 = vld [vmem:[#allocation2 + $0x128] sm:$0xff]
      %v976 = vld [vmem:[#allocation2 + $0x130] sm:$0xff]
      %v977 = vld [vmem:[#allocation2 + $0x138] sm:$0xff]
      %v978 = vld [vmem:[#allocation2 + $0x140] sm:$0xff]
      %v979 = vld [vmem:[#allocation2 + $0x148] sm:$0xff]
      %v980 = vld [vmem:[#allocation2 + $0x150] sm:$0xff]
      %v981 = vld [vmem:[#allocation2 + $0x158] sm:$0xff]
      %v982 = vld [vmem:[#allocation2 + $0x160] sm:$0xff]
      %v983 = vld [vmem:[#allocation2 + $0x168] sm:$0xff]
      %v984 = vld [vmem:[#allocation2 + $0x170] sm:$0xff]
      %v985 = vld [vmem:[#allocation2 + $0x178] sm:$0xff]
      %v986 = vld [vmem:[#allocation2 + $0x180] sm:$0xff]
      %v987 = vld [vmem:[#allocation2 + $0x188] sm:$0xff]
      %v988 = vld [vmem:[#allocation2 + $0x190] sm:$0xff]
      %v989 = vld [vmem:[#allocation2 + $0x198] sm:$0xff]
      %v990 = vld [vmem:[#allocation2 + $0x1a0] sm:$0xff]
      %v991 = vld [vmem:[#allocation2 + $0x1a8] sm:$0xff]
      %v992 = vld [vmem:[#allocation2 + $0x1b0] sm:$0xff]
      %v993 = vld [vmem:[#allocation2 + $0x1b8] sm:$0xff]
      %v994 = vld [vmem:[#allocation2 + $0x1c0] sm:$0xff]
      %v995 = vld [vmem:[#allocation2 + $0x1c8] sm:$0xff]
      %v996 = vld [vmem:[#allocation2 + $0x1d0] sm:$0xff]
      %v997 = vld [vmem:[#allocation2 + $0x1d8] sm:$0xff]
      %v998 = vld [vmem:[#allocation2 + $0x1e0] sm:$0xff]
      %v999 = vld [vmem:[#allocation2 + $0x1e8] sm:$0xff]
      %v1000 = vld [vmem:[#allocation2 + $0x1f0] sm:$0xff]
      %v1001 = vld [vmem:[#allocation2 + $0x1f8] sm:$0xff]
      %v1002 = vmul.f32 %v938, %v938
      %v1003 = vmul.f32 %v939, %v939
      %v1004 = vmul.f32 %v940, %v940
      %v1005 = vmul.f32 %v941, %v941
      %v1006 = vmul.f32 %v942, %v942
      %v1007 = vmul.f32 %v943, %v943
      %v1008 = vmul.f32 %v944, %v944
      %v1009 = vmul.f32 %v945, %v945
      %v1010 = vmul.f32 %v946, %v946
      %v1011 = vmul.f32 %v947, %v947
      %v1012 = vmul.f32 %v948, %v948
      %v1013 = vmul.f32 %v949, %v949
      %v1014 = vmul.f32 %v950, %v950
      %v1015 = vmul.f32 %v951, %v951
      %v1016 = vmul.f32 %v952, %v952
      %v1017 = vmul.f32 %v953, %v953
      %v1018 = vmul.f32 %v954, %v954
      %v1019 = vmul.f32 %v955, %v955
      %v1020 = vmul.f32 %v956, %v956
      %v1021 = vmul.f32 %v957, %v957
      %v1022 = vmul.f32 %v958, %v958
      %v1023 = vmul.f32 %v959, %v959
      %v1024 = vmul.f32 %v960, %v960
      %v1025 = vmul.f32 %v961, %v961
      %v1026 = vmul.f32 %v962, %v962
      %v1027 = vmul.f32 %v963, %v963
      %v1028 = vmul.f32 %v964, %v964
      %v1029 = vmul.f32 %v965, %v965
      %v1030 = vmul.f32 %v966, %v966
      %v1031 = vmul.f32 %v967, %v967
      %v1032 = vmul.f32 %v968, %v968
      %v1033 = vmul.f32 %v969, %v969
      %v1034 = vmul.f32 %v970, %v970
      %v1035 = vmul.f32 %v971, %v971
      %v1036 = vmul.f32 %v972, %v972
      %v1037 = vmul.f32 %v973, %v973
      %v1038 = vmul.f32 %v974, %v974
      %v1039 = vmul.f32 %v975, %v975
      %v1040 = vmul.f32 %v976, %v976
      %v1041 = vmul.f32 %v977, %v977
      %v1042 = vmul.f32 %v978, %v978
      %v1043 = vmul.f32 %v979, %v979
      %v1044 = vmul.f32 %v980, %v980
      %v1045 = vmul.f32 %v981, %v981
      %v1046 = vmul.f32 %v982, %v982
      %v1047 = vmul.f32 %v983, %v983
      %v1048 = vmul.f32 %v984, %v984
      %v1049 = vmul.f32 %v985, %v985
      %v1050 = vmul.f32 %v986, %v986
      %v1051 = vmul.f32 %v987, %v987
      %v1052 = vmul.f32 %v988, %v988
      %v1053 = vmul.f32 %v989, %v989
      %v1054 = vmul.f32 %v990, %v990
      %v1055 = vmul.f32 %v991, %v991
      %v1056 = vmul.f32 %v992, %v992
      %v1057 = vmul.f32 %v993, %v993
      %v1058 = vmul.f32 %v994, %v994
      %v1059 = vmul.f32 %v995, %v995
      %v1060 = vmul.f32 %v996, %v996
      %v1061 = vmul.f32 %v997, %v997
      %v1062 = vmul.f32 %v998, %v998
      %v1063 = vmul.f32 %v999, %v999
      %v1064 = vmul.f32 %v1000, %v1000
      %v1065 = vmul.f32 %v1001, %v1001
      %v1066 = vadd.f32 %v1002, %v1003
      %1067 = vadd.xlane.f32.xlu0 %v1066
      %v1068 = vpop.xlane.xlu0 %1067
      %v1069 = vadd.f32 %v1004, %v1005
      %1070 = vadd.xlane.f32.xlu0 %v1069
      %v1071 = vpop.xlane.xlu0 %1070
      %v1072 = vadd.f32 %v1006, %v1007
      %1073 = vadd.xlane.f32.xlu0 %v1072
      %v1074 = vpop.xlane.xlu0 %1073
      %v1075 = vadd.f32 %v1008, %v1009
      %1076 = vadd.xlane.f32.xlu0 %v1075
      %v1077 = vpop.xlane.xlu0 %1076
      %v1078 = vadd.f32 %v1010, %v1011
      %1079 = vadd.xlane.f32.xlu0 %v1078
      %v1080 = vpop.xlane.xlu0 %1079
      %v1081 = vadd.f32 %v1012, %v1013
      %1082 = vadd.xlane.f32.xlu0 %v1081
      %v1083 = vpop.xlane.xlu0 %1082
      %v1084 = vadd.f32 %v1014, %v1015
      %1085 = vadd.xlane.f32.xlu0 %v1084
      %v1086 = vpop.xlane.xlu0 %1085
      %v1087 = vadd.f32 %v1016, %v1017
      %1088 = vadd.xlane.f32.xlu0 %v1087
      %v1089 = vpop.xlane.xlu0 %1088
      %v1090 = vadd.f32 %v1018, %v1019
      %1091 = vadd.xlane.f32.xlu0 %v1090
      %v1092 = vpop.xlane.xlu0 %1091
      %v1093 = vadd.f32 %v1020, %v1021
      %1094 = vadd.xlane.f32.xlu0 %v1093
      %v1095 = vpop.xlane.xlu0 %1094
      %v1096 = vadd.f32 %v1022, %v1023
      %1097 = vadd.xlane.f32.xlu0 %v1096
      %v1098 = vpop.xlane.xlu0 %1097
      %v1099 = vadd.f32 %v1024, %v1025
      %1100 = vadd.xlane.f32.xlu0 %v1099
      %v1101 = vpop.xlane.xlu0 %1100
      %v1102 = vadd.f32 %v1026, %v1027
      %1103 = vadd.xlane.f32.xlu0 %v1102
      %v1104 = vpop.xlane.xlu0 %1103
      %v1105 = vadd.f32 %v1028, %v1029
      %1106 = vadd.xlane.f32.xlu0 %v1105
      %v1107 = vpop.xlane.xlu0 %1106
      %v1108 = vadd.f32 %v1030, %v1031
      %1109 = vadd.xlane.f32.xlu0 %v1108
      %v1110 = vpop.xlane.xlu0 %1109
      %v1111 = vadd.f32 %v1032, %v1033
      %1112 = vadd.xlane.f32.xlu0 %v1111
      %v1113 = vpop.xlane.xlu0 %1112
      %v1114 = vadd.f32 %v1034, %v1035
      %1115 = vadd.xlane.f32.xlu0 %v1114
      %v1116 = vpop.xlane.xlu0 %1115
      %v1117 = vadd.f32 %v1036, %v1037
      %1118 = vadd.xlane.f32.xlu0 %v1117
      %v1119 = vpop.xlane.xlu0 %1118
      %v1120 = vadd.f32 %v1038, %v1039
      %1121 = vadd.xlane.f32.xlu0 %v1120
      %v1122 = vpop.xlane.xlu0 %1121
      %v1123 = vadd.f32 %v1040, %v1041
      %1124 = vadd.xlane.f32.xlu0 %v1123
      %v1125 = vpop.xlane.xlu0 %1124
      %v1126 = vadd.f32 %v1042, %v1043
      %1127 = vadd.xlane.f32.xlu0 %v1126
      %v1128 = vpop.xlane.xlu0 %1127
      %v1129 = vadd.f32 %v1044, %v1045
      %1130 = vadd.xlane.f32.xlu0 %v1129
      %v1131 = vpop.xlane.xlu0 %1130
      %v1132 = vadd.f32 %v1046, %v1047
      %1133 = vadd.xlane.f32.xlu0 %v1132
      %v1134 = vpop.xlane.xlu0 %1133
      %v1135 = vadd.f32 %v1048, %v1049
      %1136 = vadd.xlane.f32.xlu0 %v1135
      %v1137 = vpop.xlane.xlu0 %1136
      %v1138 = vadd.f32 %v1050, %v1051
      %1139 = vadd.xlane.f32.xlu0 %v1138
      %v1140 = vpop.xlane.xlu0 %1139
      %v1141 = vadd.f32 %v1052, %v1053
      %1142 = vadd.xlane.f32.xlu0 %v1141
      %v1143 = vpop.xlane.xlu0 %1142
      %v1144 = vadd.f32 %v1054, %v1055
      %1145 = vadd.xlane.f32.xlu0 %v1144
      %v1146 = vpop.xlane.xlu0 %1145
      %v1147 = vadd.f32 %v1056, %v1057
      %1148 = vadd.xlane.f32.xlu0 %v1147
      %v1149 = vpop.xlane.xlu0 %1148
      %v1150 = vadd.f32 %v1058, %v1059
      %1151 = vadd.xlane.f32.xlu0 %v1150
      %v1152 = vpop.xlane.xlu0 %1151
      %v1153 = vadd.f32 %v1060, %v1061
      %1154 = vadd.xlane.f32.xlu0 %v1153
      %v1155 = vpop.xlane.xlu0 %1154
      %v1156 = vadd.f32 %v1062, %v1063
      %1157 = vadd.xlane.f32.xlu0 %v1156
      %v1158 = vpop.xlane.xlu0 %1157
      %v1159 = vadd.f32 %v1064, %v1065
      %1160 = vadd.xlane.f32.xlu0 %v1159
      %v1161 = vpop.xlane.xlu0 %1160
      %v1162 = vadd.f32 %v1068, %v1071
      %v1163 = vadd.f32 %v1162, %v1074
      %v1164 = vadd.f32 %v1163, %v1077
      %v1165 = vadd.f32 %v1164, %v1080
      %v1166 = vadd.f32 %v1165, %v1083
      %v1167 = vadd.f32 %v1166, %v1086
      %v1168 = vadd.f32 %v1167, %v1089
      %v1169 = vadd.f32 %v1168, %v1092
      %v1170 = vadd.f32 %v1169, %v1095
      %v1171 = vadd.f32 %v1170, %v1098
      %v1172 = vadd.f32 %v1171, %v1101
      %v1173 = vadd.f32 %v1172, %v1104
      %v1174 = vadd.f32 %v1173, %v1107
      %v1175 = vadd.f32 %v1174, %v1110
      %v1176 = vadd.f32 %v1175, %v1113
      %v1177 = vadd.f32 %v1176, %v1116
      %v1178 = vadd.f32 %v1177, %v1119
      %v1179 = vadd.f32 %v1178, %v1122
      %v1180 = vadd.f32 %v1179, %v1125
      %v1181 = vadd.f32 %v1180, %v1128
      %v1182 = vadd.f32 %v1181, %v1131
      %v1183 = vadd.f32 %v1182, %v1134
      %v1184 = vadd.f32 %v1183, %v1137
      %v1185 = vadd.f32 %v1184, %v1140
      %v1186 = vadd.f32 %v1185, %v1143
      %v1187 = vadd.f32 %v1186, %v1146
      %v1188 = vadd.f32 %v1187, %v1149
      %v1189 = vadd.f32 %v1188, %v1152
      %v1190 = vadd.f32 %v1189, %v1155
      %v1191 = vadd.f32 %v1190, %v1158
      %v1192 = vadd.f32 %v1191, %v1161
      %v1193 = vrot.slane %v1192, 4
      %v1194 = vadd.f32 %v1192, %v1193
      %v1195 = vrot.slane %v1194, 2
      %v1196 = vadd.f32 %v1194, %v1195
      %v1197 = vrot.slane %v1196, 1
      %v1198 = vadd.f32 %v1196, %v1197
      %v1199 = vlaneseq
      %v1200 = vshrl.u32 %v1199, 7
      %v1201 = vadd.s32 %v1200, 8
      %v1202 = vadd.s32 %v1200, 16
      %v1203 = vadd.s32 %v1200, 24
      %v1204 = vadd.s32 %v1200, 32
      %v1205 = vadd.s32 %v1200, 40
      %v1206 = vadd.s32 %v1200, 48
      %v1207 = vadd.s32 %v1200, 56
      %v1208 = vadd.s32 %v1200, 64
      %v1209 = vadd.s32 %v1200, 72
      %v1210 = vadd.s32 %v1200, 80
      %v1211 = vadd.s32 %v1200, 88
      %v1212 = vadd.s32 %v1200, 96
      %v1213 = vadd.s32 %v1200, 104
      %v1214 = vadd.s32 %v1200, 112
      %v1215 = vadd.s32 %v1200, 120
      %v1216 = vadd.s32 %v1200, 128
      %v1217 = vadd.s32 %v1200, 136
      %v1218 = vadd.s32 %v1200, 144
      %v1219 = vadd.s32 %v1200, 152
      %v1220 = vadd.s32 %v1200, 160
      %v1221 = vadd.s32 %v1200, 168
      %v1222 = vadd.s32 %v1200, 176
      %v1223 = vadd.s32 %v1200, 184
      %v1224 = vadd.s32 %v1200, 192
      %v1225 = vadd.s32 %v1200, 200
      %v1226 = vadd.s32 %v1200, 208
      %v1227 = vadd.s32 %v1200, 216
      %v1228 = vadd.s32 %v1200, 224
      %v1229 = vadd.s32 %v1200, 232
      %v1230 = vadd.s32 %v1200, 240
      %v1231 = vadd.s32 %v1200, 248
      %v1232 = vlaneseq
      %v1233 = vand.u32 %v1232, 127
      %v1234 = vadd.s32 %v1233, 128
      %vm1235 = vcmp.eq.s32.totalorder %v1200, %v1233
      %vm1236 = vcmp.eq.s32.totalorder %v1200, %v1234
      %vm1237 = vcmp.eq.s32.totalorder %v1201, %v1233
      %vm1238 = vcmp.eq.s32.totalorder %v1201, %v1234
      %vm1239 = vcmp.eq.s32.totalorder %v1202, %v1233
      %vm1240 = vcmp.eq.s32.totalorder %v1202, %v1234
      %vm1241 = vcmp.eq.s32.totalorder %v1203, %v1233
      %vm1242 = vcmp.eq.s32.totalorder %v1203, %v1234
      %vm1243 = vcmp.eq.s32.totalorder %v1204, %v1233
      %vm1244 = vcmp.eq.s32.totalorder %v1204, %v1234
      %vm1245 = vcmp.eq.s32.totalorder %v1205, %v1233
      %vm1246 = vcmp.eq.s32.totalorder %v1205, %v1234
      %vm1247 = vcmp.eq.s32.totalorder %v1206, %v1233
      %vm1248 = vcmp.eq.s32.totalorder %v1206, %v1234
      %vm1249 = vcmp.eq.s32.totalorder %v1207, %v1233
      %vm1250 = vcmp.eq.s32.totalorder %v1207, %v1234
      %vm1251 = vcmp.eq.s32.totalorder %v1208, %v1233
      %vm1252 = vcmp.eq.s32.totalorder %v1208, %v1234
      %vm1253 = vcmp.eq.s32.totalorder %v1209, %v1233
      %vm1254 = vcmp.eq.s32.totalorder %v1209, %v1234
      %vm1255 = vcmp.eq.s32.totalorder %v1210, %v1233
      %vm1256 = vcmp.eq.s32.totalorder %v1210, %v1234
      %vm1257 = vcmp.eq.s32.totalorder %v1211, %v1233
      %vm1258 = vcmp.eq.s32.totalorder %v1211, %v1234
      %vm1259 = vcmp.eq.s32.totalorder %v1212, %v1233
      %vm1260 = vcmp.eq.s32.totalorder %v1212, %v1234
      %vm1261 = vcmp.eq.s32.totalorder %v1213, %v1233
      %vm1262 = vcmp.eq.s32.totalorder %v1213, %v1234
      %vm1263 = vcmp.eq.s32.totalorder %v1214, %v1233
      %vm1264 = vcmp.eq.s32.totalorder %v1214, %v1234
      %vm1265 = vcmp.eq.s32.totalorder %v1215, %v1233
      %vm1266 = vcmp.eq.s32.totalorder %v1215, %v1234
      %vm1267 = vcmp.eq.s32.totalorder %v1216, %v1233
      %vm1268 = vcmp.eq.s32.totalorder %v1216, %v1234
      %vm1269 = vcmp.eq.s32.totalorder %v1217, %v1233
      %vm1270 = vcmp.eq.s32.totalorder %v1217, %v1234
      %vm1271 = vcmp.eq.s32.totalorder %v1218, %v1233
      %vm1272 = vcmp.eq.s32.totalorder %v1218, %v1234
      %vm1273 = vcmp.eq.s32.totalorder %v1219, %v1233
      %vm1274 = vcmp.eq.s32.totalorder %v1219, %v1234
      %vm1275 = vcmp.eq.s32.totalorder %v1220, %v1233
      %vm1276 = vcmp.eq.s32.totalorder %v1220, %v1234
      %vm1277 = vcmp.eq.s32.totalorder %v1221, %v1233
      %vm1278 = vcmp.eq.s32.totalorder %v1221, %v1234
      %vm1279 = vcmp.eq.s32.totalorder %v1222, %v1233
      %vm1280 = vcmp.eq.s32.totalorder %v1222, %v1234
      %vm1281 = vcmp.eq.s32.totalorder %v1223, %v1233
      %vm1282 = vcmp.eq.s32.totalorder %v1223, %v1234
      %vm1283 = vcmp.eq.s32.totalorder %v1224, %v1233
      %vm1284 = vcmp.eq.s32.totalorder %v1224, %v1234
      %vm1285 = vcmp.eq.s32.totalorder %v1225, %v1233
      %vm1286 = vcmp.eq.s32.totalorder %v1225, %v1234
      %vm1287 = vcmp.eq.s32.totalorder %v1226, %v1233
      %vm1288 = vcmp.eq.s32.totalorder %v1226, %v1234
      %vm1289 = vcmp.eq.s32.totalorder %v1227, %v1233
      %vm1290 = vcmp.eq.s32.totalorder %v1227, %v1234
      %vm1291 = vcmp.eq.s32.totalorder %v1228, %v1233
      %vm1292 = vcmp.eq.s32.totalorder %v1228, %v1234
      %vm1293 = vcmp.eq.s32.totalorder %v1229, %v1233
      %vm1294 = vcmp.eq.s32.totalorder %v1229, %v1234
      %vm1295 = vcmp.eq.s32.totalorder %v1230, %v1233
      %vm1296 = vcmp.eq.s32.totalorder %v1230, %v1234
      %vm1297 = vcmp.eq.s32.totalorder %v1231, %v1233
      %vm1298 = vcmp.eq.s32.totalorder %v1231, %v1234
      %v1299 = vsel %vm1235, %v938, 0.0
      %v1300 = vsel %vm1236, %v939, 0.0
      %v1301 = vsel %vm1237, %v940, 0.0
      %v1302 = vsel %vm1238, %v941, 0.0
      %v1303 = vsel %vm1239, %v942, 0.0
      %v1304 = vsel %vm1240, %v943, 0.0
      %v1305 = vsel %vm1241, %v944, 0.0
      %v1306 = vsel %vm1242, %v945, 0.0
      %v1307 = vsel %vm1243, %v946, 0.0
      %v1308 = vsel %vm1244, %v947, 0.0
      %v1309 = vsel %vm1245, %v948, 0.0
      %v1310 = vsel %vm1246, %v949, 0.0
      %v1311 = vsel %vm1247, %v950, 0.0
      %v1312 = vsel %vm1248, %v951, 0.0
      %v1313 = vsel %vm1249, %v952, 0.0
      %v1314 = vsel %vm1250, %v953, 0.0
      %v1315 = vsel %vm1251, %v954, 0.0
      %v1316 = vsel %vm1252, %v955, 0.0
      %v1317 = vsel %vm1253, %v956, 0.0
      %v1318 = vsel %vm1254, %v957, 0.0
      %v1319 = vsel %vm1255, %v958, 0.0
      %v1320 = vsel %vm1256, %v959, 0.0
      %v1321 = vsel %vm1257, %v960, 0.0
      %v1322 = vsel %vm1258, %v961, 0.0
      %v1323 = vsel %vm1259, %v962, 0.0
      %v1324 = vsel %vm1260, %v963, 0.0
      %v1325 = vsel %vm1261, %v964, 0.0
      %v1326 = vsel %vm1262, %v965, 0.0
      %v1327 = vsel %vm1263, %v966, 0.0
      %v1328 = vsel %vm1264, %v967, 0.0
      %v1329 = vsel %vm1265, %v968, 0.0
      %v1330 = vsel %vm1266, %v969, 0.0
      %v1331 = vsel %vm1267, %v970, 0.0
      %v1332 = vsel %vm1268, %v971, 0.0
      %v1333 = vsel %vm1269, %v972, 0.0
      %v1334 = vsel %vm1270, %v973, 0.0
      %v1335 = vsel %vm1271, %v974, 0.0
      %v1336 = vsel %vm1272, %v975, 0.0
      %v1337 = vsel %vm1273, %v976, 0.0
      %v1338 = vsel %vm1274, %v977, 0.0
      %v1339 = vsel %vm1275, %v978, 0.0
      %v1340 = vsel %vm1276, %v979, 0.0
      %v1341 = vsel %vm1277, %v980, 0.0
      %v1342 = vsel %vm1278, %v981, 0.0
      %v1343 = vsel %vm1279, %v982, 0.0
      %v1344 = vsel %vm1280, %v983, 0.0
      %v1345 = vsel %vm1281, %v984, 0.0
      %v1346 = vsel %vm1282, %v985, 0.0
      %v1347 = vsel %vm1283, %v986, 0.0
      %v1348 = vsel %vm1284, %v987, 0.0
      %v1349 = vsel %vm1285, %v988, 0.0
      %v1350 = vsel %vm1286, %v989, 0.0
      %v1351 = vsel %vm1287, %v990, 0.0
      %v1352 = vsel %vm1288, %v991, 0.0
      %v1353 = vsel %vm1289, %v992, 0.0
      %v1354 = vsel %vm1290, %v993, 0.0
      %v1355 = vsel %vm1291, %v994, 0.0
      %v1356 = vsel %vm1292, %v995, 0.0
      %v1357 = vsel %vm1293, %v996, 0.0
      %v1358 = vsel %vm1294, %v997, 0.0
      %v1359 = vsel %vm1295, %v998, 0.0
      %v1360 = vsel %vm1296, %v999, 0.0
      %v1361 = vsel %vm1297, %v1000, 0.0
      %v1362 = vsel %vm1298, %v1001, 0.0
      %v1363 = vadd.f32 %v1299, %v1300
      %1364 = vadd.xlane.f32.xlu0 %v1363
      %v1365 = vpop.xlane.xlu0 %1364
      %v1366 = vadd.f32 %v1301, %v1302
      %1367 = vadd.xlane.f32.xlu0 %v1366
      %v1368 = vpop.xlane.xlu0 %1367
      %v1369 = vadd.f32 %v1303, %v1304
      %1370 = vadd.xlane.f32.xlu0 %v1369
      %v1371 = vpop.xlane.xlu0 %1370
      %v1372 = vadd.f32 %v1305, %v1306
      %1373 = vadd.xlane.f32.xlu0 %v1372
      %v1374 = vpop.xlane.xlu0 %1373
      %v1375 = vadd.f32 %v1307, %v1308
      %1376 = vadd.xlane.f32.xlu0 %v1375
      %v1377 = vpop.xlane.xlu0 %1376
      %v1378 = vadd.f32 %v1309, %v1310
      %1379 = vadd.xlane.f32.xlu0 %v1378
      %v1380 = vpop.xlane.xlu0 %1379
      %v1381 = vadd.f32 %v1311, %v1312
      %1382 = vadd.xlane.f32.xlu0 %v1381
      %v1383 = vpop.xlane.xlu0 %1382
      %v1384 = vadd.f32 %v1313, %v1314
      %1385 = vadd.xlane.f32.xlu0 %v1384
      %v1386 = vpop.xlane.xlu0 %1385
      %v1387 = vadd.f32 %v1315, %v1316
      %1388 = vadd.xlane.f32.xlu0 %v1387
      %v1389 = vpop.xlane.xlu0 %1388
      %v1390 = vadd.f32 %v1317, %v1318
      %1391 = vadd.xlane.f32.xlu0 %v1390
      %v1392 = vpop.xlane.xlu0 %1391
      %v1393 = vadd.f32 %v1319, %v1320
      %1394 = vadd.xlane.f32.xlu0 %v1393
      %v1395 = vpop.xlane.xlu0 %1394
      %v1396 = vadd.f32 %v1321, %v1322
      %1397 = vadd.xlane.f32.xlu0 %v1396
      %v1398 = vpop.xlane.xlu0 %1397
      %v1399 = vadd.f32 %v1323, %v1324
      %1400 = vadd.xlane.f32.xlu0 %v1399
      %v1401 = vpop.xlane.xlu0 %1400
      %v1402 = vadd.f32 %v1325, %v1326
      %1403 = vadd.xlane.f32.xlu0 %v1402
      %v1404 = vpop.xlane.xlu0 %1403
      %v1405 = vadd.f32 %v1327, %v1328
      %1406 = vadd.xlane.f32.xlu0 %v1405
      %v1407 = vpop.xlane.xlu0 %1406
      %v1408 = vadd.f32 %v1329, %v1330
      %1409 = vadd.xlane.f32.xlu0 %v1408
      %v1410 = vpop.xlane.xlu0 %1409
      %v1411 = vadd.f32 %v1331, %v1332
      %1412 = vadd.xlane.f32.xlu0 %v1411
      %v1413 = vpop.xlane.xlu0 %1412
      %v1414 = vadd.f32 %v1333, %v1334
      %1415 = vadd.xlane.f32.xlu0 %v1414
      %v1416 = vpop.xlane.xlu0 %1415
      %v1417 = vadd.f32 %v1335, %v1336
      %1418 = vadd.xlane.f32.xlu0 %v1417
      %v1419 = vpop.xlane.xlu0 %1418
      %v1420 = vadd.f32 %v1337, %v1338
      %1421 = vadd.xlane.f32.xlu0 %v1420
      %v1422 = vpop.xlane.xlu0 %1421
      %v1423 = vadd.f32 %v1339, %v1340
      %1424 = vadd.xlane.f32.xlu0 %v1423
      %v1425 = vpop.xlane.xlu0 %1424
      %v1426 = vadd.f32 %v1341, %v1342
      %1427 = vadd.xlane.f32.xlu0 %v1426
      %v1428 = vpop.xlane.xlu0 %1427
      %v1429 = vadd.f32 %v1343, %v1344
      %1430 = vadd.xlane.f32.xlu0 %v1429
      %v1431 = vpop.xlane.xlu0 %1430
      %v1432 = vadd.f32 %v1345, %v1346
      %1433 = vadd.xlane.f32.xlu0 %v1432
      %v1434 = vpop.xlane.xlu0 %1433
      %v1435 = vadd.f32 %v1347, %v1348
      %1436 = vadd.xlane.f32.xlu0 %v1435
      %v1437 = vpop.xlane.xlu0 %1436
      %v1438 = vadd.f32 %v1349, %v1350
      %1439 = vadd.xlane.f32.xlu0 %v1438
      %v1440 = vpop.xlane.xlu0 %1439
      %v1441 = vadd.f32 %v1351, %v1352
      %1442 = vadd.xlane.f32.xlu0 %v1441
      %v1443 = vpop.xlane.xlu0 %1442
      %v1444 = vadd.f32 %v1353, %v1354
      %1445 = vadd.xlane.f32.xlu0 %v1444
      %v1446 = vpop.xlane.xlu0 %1445
      %v1447 = vadd.f32 %v1355, %v1356
      %1448 = vadd.xlane.f32.xlu0 %v1447
      %v1449 = vpop.xlane.xlu0 %1448
      %v1450 = vadd.f32 %v1357, %v1358
      %1451 = vadd.xlane.f32.xlu0 %v1450
      %v1452 = vpop.xlane.xlu0 %1451
      %v1453 = vadd.f32 %v1359, %v1360
      %1454 = vadd.xlane.f32.xlu0 %v1453
      %v1455 = vpop.xlane.xlu0 %1454
      %v1456 = vadd.f32 %v1361, %v1362
      %1457 = vadd.xlane.f32.xlu0 %v1456
      %v1458 = vpop.xlane.xlu0 %1457
      %v1459 = vadd.f32 %v1365, %v1368
      %v1460 = vadd.f32 %v1459, %v1371
      %v1461 = vadd.f32 %v1460, %v1374
      %v1462 = vadd.f32 %v1461, %v1377
      %v1463 = vadd.f32 %v1462, %v1380
      %v1464 = vadd.f32 %v1463, %v1383
      %v1465 = vadd.f32 %v1464, %v1386
      %v1466 = vadd.f32 %v1465, %v1389
      %v1467 = vadd.f32 %v1466, %v1392
      %v1468 = vadd.f32 %v1467, %v1395
      %v1469 = vadd.f32 %v1468, %v1398
      %v1470 = vadd.f32 %v1469, %v1401
      %v1471 = vadd.f32 %v1470, %v1404
      %v1472 = vadd.f32 %v1471, %v1407
      %v1473 = vadd.f32 %v1472, %v1410
      %v1474 = vadd.f32 %v1473, %v1413
      %v1475 = vadd.f32 %v1474, %v1416
      %v1476 = vadd.f32 %v1475, %v1419
      %v1477 = vadd.f32 %v1476, %v1422
      %v1478 = vadd.f32 %v1477, %v1425
      %v1479 = vadd.f32 %v1478, %v1428
      %v1480 = vadd.f32 %v1479, %v1431
      %v1481 = vadd.f32 %v1480, %v1434
      %v1482 = vadd.f32 %v1481, %v1437
      %v1483 = vadd.f32 %v1482, %v1440
      %v1484 = vadd.f32 %v1483, %v1443
      %v1485 = vadd.f32 %v1484, %v1446
      %v1486 = vadd.f32 %v1485, %v1449
      %v1487 = vadd.f32 %v1486, %v1452
      %v1488 = vadd.f32 %v1487, %v1455
      %v1489 = vadd.f32 %v1488, %v1458
      %v1490 = vrot.slane %v1489, 4
      %v1491 = vadd.f32 %v1489, %v1490
      %v1492 = vrot.slane %v1491, 2
      %v1493 = vadd.f32 %v1491, %v1492
      %v1494 = vrot.slane %v1493, 1
      %v1495 = vadd.f32 %v1493, %v1494
      %v1496 = vmul.f32 %v1495, 2.0
      %v1497 = vsub.f32 %v1198, %v1496
      %v1498 = vadd.f32 %v1497, 256.0
      %vm1499 = vcmask 0
      %1500 = vst.msk [vmem:[#allocation6] sm:$0x1] %vm1499, %v1498
    $region17: #{tpu_custom_call.1} parent=1 // pred_fallthru
      _
    // Predicated region
    $region18: #{tpu_custom_call.1} parent=1 // pred_check
      _
    $region19: #{tpu_custom_call.1} parent=1 // pred_check_branch
      %1502 = sbr.rel (0) target = $region21
    $region20: #{tpu_custom_call.1} parent=1 // pred_region
      %s1504 = ssub.s32 16, 16
      %1505 = vsyncadd [#allocation5], %s1504
      %s1507 = sshll.u32 [#allocation6], 4
      %s1508 = int_to_ptr.vmem [resolvable:$true] %s1507
      %1510 = dma.vmem_to_hbm [thread:$0]  %s1508, 16, %s1, [#allocation5]
    $region21: #{tpu_custom_call.1} parent=1 // pred_fallthru
      _
    // Predicated region
    $region22: #{tpu_custom_call.1} parent=1 // pred_check
      _
    $region23: #{tpu_custom_call.1} parent=1 // pred_check_branch
      %1512 = sbr.rel (0) target = $region25
    $region24: #{tpu_custom_call.1} parent=1 // pred_region
      %1513 = dma.done [#allocation5], 16
    $region25: #{tpu_custom_call.1} parent=1 // pred_fallthru
      _
    %1514 = vsyncpa [#allocation4], 1
    %1515 = vsyncpa [#allocation5], 1

</llo_original>
